<compile_context>
chip_gen: v5e
topology: v5e:2x2
jax: 0.10.0
libtpu: 0.0.40
codegen_flags: <defaults>
</compile_context>

<pallas_src>
import functools
import math

import jax
import jax.numpy as jnp
from jax import lax
from jax.experimental import pallas as pl
from jax.experimental.pallas import tpu as pltpu


def _round_up(x, m):
    return (x + m - 1) // m * m


def _pick_block_batch(batch, seq_pad, max_rows=1024):
    """Largest per-step batch block that (a) divides `batch`, (b) keeps the
    fused matmul M dim <= max_rows, and (c) leaves >= 2 grid steps when
    batch >= 2 so both v7x TensorCores get work on the 'parallel' axis."""
    best = 1
    for bt in range(1, batch + 1):
        if batch % bt:
            continue
        if bt * seq_pad > max_rows:
            break
        if batch // bt >= 2 or batch < 2:
            best = bt
    return best


# ----------------------------------------------------------------------------
# Fused kernel: QKV projection (all heads) + per-head attention + output proj
# ----------------------------------------------------------------------------
def _fused_mha_kernel(x_ref, wqkv_ref, bqkv_ref, wproj_ref, bproj_ref, o_ref,
                      qkv_ref, heads_ref, *, num_heads, head_size,
                      block_batch, seq_len, seq_pad):
    H, S = num_heads, head_size
    HS = H * S
    Tp = seq_pad

    # ---- Fused QKV projection: ONE MXU matmul for all heads & all rows ----
    # Operands stay in their storage dtype (bf16-native MXU on v5e/v6e/v7x);
    # accumulation in f32 via preferred_element_type.
    qkv = jnp.dot(x_ref[...], wqkv_ref[...], preferred_element_type=jnp.float32)
    qkv_ref[...] = (qkv + bqkv_ref[...]).astype(qkv_ref.dtype)   # VMEM scratch

    # Key-position mask, only when the sequence was padded (static check).
    padded = Tp != seq_len
    if padded:
        key_idx = lax.broadcasted_iota(jnp.int32, (Tp, Tp), 1)
        key_mask = jnp.where(key_idx < seq_len, 0.0, -1e30).astype(jnp.float32)

    # ---- Per-(batch-element, head) attention; q/k/v are static Ref slices --
    for b in range(block_batch):
        r0 = b * Tp
        for h in range(H):
            q = qkv_ref[r0:r0 + Tp, h * S:(h + 1) * S]
            k = qkv_ref[r0:r0 + Tp, HS + h * S:HS + (h + 1) * S]
            v = qkv_ref[r0:r0 + Tp, 2 * HS + h * S:2 * HS + (h + 1) * S]

            # q already carries 1/sqrt(S) (folded into W_q / b_q in wrapper);
            # contract last dims -> no explicit transpose of k.
            scores = lax.dot_general(q, k, (((1,), (1,)), ((), ())),
                                     preferred_element_type=jnp.float32)
            if padded:
                scores = scores + key_mask

            # Numerically stable softmax over the key axis.
            m = jnp.max(scores, axis=-1, keepdims=True)
            e = jnp.exp(scores - m)
            denom = jnp.sum(e, axis=-1, keepdims=True)
            wei = e * pl.reciprocal(denom, approx=True)          # EUP slot
            # (eval-mode dropout == identity)

            out_h = jnp.dot(wei.astype(v.dtype), v,
                            preferred_element_type=jnp.float32)  # (Tp, S)
            heads_ref[r0:r0 + Tp, h * S:(h + 1) * S] = out_h.astype(heads_ref.dtype)

    # ---- ONE fused output projection over all heads (K = H*S) ----
    y = jnp.dot(heads_ref[...], wproj_ref[...],
                preferred_element_type=jnp.float32) + bproj_ref[...]
    o_ref[...] = y.astype(o_ref.dtype)


# ----------------------------------------------------------------------------
# Wrapper: fused lane-dense weight packing + pallas_call
# ----------------------------------------------------------------------------
def multi_head_attention(x, params, *, compute_dtype=None):
    """Reproduces MultiHeadAttention.forward (eval mode).

    x: (B, T, D); params["wq"/"wk"/"wv"]: (H, D, S); "bq"/"bk"/"bv": (H, S);
    "w_proj": (H*S, D); "b_proj": (D,).  Returns (B, T, D) in x.dtype.
    `compute_dtype` controls the MXU-operand dtype (use bf16 at real sizes).
    """
    B, T, D = x.shape
    H, _, S = params["wq"].shape
    HS = H * S
    compute_dtype = jnp.dtype(x.dtype if compute_dtype is None else compute_dtype)

    # Sublane-aligned sequence length (8 rows for 32-bit, 16 for 16-bit).
    sub = max(8, 32 // compute_dtype.itemsize)
    Tp = _round_up(T, sub)
    Bt = _pick_block_batch(B, Tp)
    steps = B // Bt
    rows = Bt * Tp

    # One-time layout glue (trace time, outside the kernel): fused, lane-dense
    # weights with the 1/sqrt(S) softmax scale folded into W_q / b_q.
    scale = 1.0 / math.sqrt(S)
    w_qkv = jnp.concatenate(
        [(params["wq"] * scale).transpose(1, 0, 2).reshape(D, HS),
         params["wk"].transpose(1, 0, 2).reshape(D, HS),
         params["wv"].transpose(1, 0, 2).reshape(D, HS)],
        axis=-1).astype(compute_dtype)                              # (D, 3*H*S)
    b_qkv = jnp.concatenate(
        [(params["bq"] * scale).reshape(1, HS),
         params["bk"].reshape(1, HS),
         params["bv"].reshape(1, HS)], axis=-1).astype(jnp.float32)  # (1, 3*H*S)
    w_proj = params["w_proj"].astype(compute_dtype)                  # (H*S, D)
    b_proj = params["b_proj"].reshape(1, D).astype(jnp.float32)      # (1, D)

    # Pad the sequence to the sublane multiple and flatten (B,Tp,D)->(B*Tp,D)
    # so the kernel's matmuls see lane/sublane-dense 2-D operands.
    xp = x.astype(compute_dtype)
    if Tp != T:
        xp = jnp.pad(xp, ((0, 0), (0, Tp - T), (0, 0)))
    xp = xp.reshape(B * Tp, D)

    kernel = functools.partial(_fused_mha_kernel, num_heads=H, head_size=S,
                               block_batch=Bt, seq_len=T, seq_pad=Tp)

    # Explicit VMEM budget: default scoped limit is 16 MiB (v5e) / 32 MiB
    # (v6e, v7x); v7x physical is 64 MiB/TC, so cap there.
    cbytes = compute_dtype.itemsize
    est = (2 * rows * D * cbytes                      # x block (double-buffered)
           + 2 * rows * D * x.dtype.itemsize          # out block (double-buffered)
           + rows * (3 * HS + HS) * cbytes            # qkv + heads scratch
           + (D * 3 * HS + HS * D) * cbytes           # resident weights
           + (3 * HS + D) * 4)                        # biases
    vmem_limit = int(min(64 << 20, max(2 * est + (4 << 20), 32 << 20)))

    def build(single_buffer_weights):
        # Weights/biases have constant index_maps: DMA'd once, VMEM-resident
        # across all grid steps. Buffered(1) disables their double-buffering
        # (they never change), halving resident weight VMEM.
        wmode = ({"pipeline_mode": pl.Buffered(1)}
                 if single_buffer_weights else {})

        def wspec(shape):
            return pl.BlockSpec(shape, lambda i: (0,) * len(shape), **wmode)

        return pl.pallas_call(
            kernel,
            out_shape=jax.ShapeDtypeStruct((B * Tp, D), x.dtype),
            grid_spec=pltpu.PrefetchScalarGridSpec(
                num_scalar_prefetch=0,
                grid=(steps,),                                   # batch-parallel
                in_specs=[
                    pl.BlockSpec((rows, D), lambda i: (i, 0)),   # x rows
                    wspec((D, 3 * HS)),                          # fused W_qkv
                    wspec((1, 3 * HS)),                          # fused b_qkv
                    wspec((HS, D)),                              # W_proj
                    wspec((1, D)),                               # b_proj
                ],
                out_specs=pl.BlockSpec((rows, D), lambda i: (i, 0)),
                scratch_shapes=[
                    pltpu.VMEM((rows, 3 * HS), compute_dtype),   # fused qkv
                    pltpu.VMEM((rows, HS), compute_dtype),       # concat heads
                ],
            ),
            # Note: "parallel" only helps on multi-TC chips (v7x); on v5e/v6e
            # the grid is a serial loop and the wins are the in-step changes.
            compiler_params=pltpu.CompilerParams(
                dimension_semantics=("parallel",),
                vmem_limit_bytes=vmem_limit),
        )

    args = (xp, w_qkv, b_qkv, w_proj, b_proj)
    try:
        out = jax.block_until_ready(build(True)(*args))
    except Exception:
        # JAX build without pipeline_mode/Buffered(1) support on pallas_call:
        # fall back to default (double-buffered) constant weight blocks.
        out = jax.block_until_ready(build(False)(*args))

    out = out.reshape(B, Tp, D)
    return out[:, :T, :] if Tp != T else out


# ----------------------------------------------------------------------------
# Params + pure-JAX reference
# ----------------------------------------------------------------------------
def init_params(key, num_heads, head_size, d_emb, dtype=jnp.float32):
    ks = jax.random.split(key, 8)
    scale = 0.02
    return {
        "wq": scale * jax.random.normal(ks[0], (num_heads, d_emb, head_size), dtype),
        "bq": scale * jax.random.normal(ks[1], (num_heads, head_size), dtype),
        "wk": scale * jax.random.normal(ks[2], (num_heads, d_emb, head_size), dtype),
        "bk": scale * jax.random.normal(ks[3], (num_heads, head_size), dtype),
        "wv": scale * jax.random.normal(ks[4], (num_heads, d_emb, head_size), dtype),
        "bv": scale * jax.random.normal(ks[5], (num_heads, head_size), dtype),
        "w_proj": scale * jax.random.normal(ks[6], (num_heads * head_size, d_emb), dtype),
        "b_proj": scale * jax.random.normal(ks[7], (d_emb,), dtype),
    }


def _reference(x, p):
    H = p["wq"].shape[0]
    S = p["wq"].shape[2]
    outs = []
    for h in range(H):
        q = x @ p["wq"][h] + p["bq"][h]
        k = x @ p["wk"][h] + p["bk"][h]
        v = x @ p["wv"][h] + p["bv"][h]
        wei = jax.nn.softmax(q @ jnp.swapaxes(k, -1, -2) / math.sqrt(S), axis=-1)
        outs.append(wei @ v)
    cat = jnp.concatenate(outs, axis=-1)
    return cat @ p["w_proj"] + p["b_proj"]


if __name__ == "__main__":
    key = jax.random.PRNGKey(0)
    B, T = 2, 8            # batch, sequence of flattened patches
    d_emb = 32             # flattened patch dim
    num_heads = 2
    head_size = 16

    k_x, k_p = jax.random.split(key)
    x = jax.random.normal(k_x, (B, T, d_emb), jnp.float32)
    params = init_params(k_p, num_heads, head_size, d_emb)

    ref = _reference(x, params)

    # f32 path: tight check against the pure-JAX reference.
    out = jax.block_until_ready(multi_head_attention(x, params))
    assert out.shape == (B, T, d_emb), out.shape
    assert jnp.allclose(out, ref, atol=1e-3, rtol=1e-3), \
        float(jnp.max(jnp.abs(out - ref)))

    # bf16 path: MXU-native dtype + padded/masked-sequence code path.
    out_bf16 = jax.block_until_ready(
        multi_head_attention(x, params, compute_dtype=jnp.bfloat16))
    assert out_bf16.shape == (B, T, d_emb), out_bf16.shape
    assert jnp.allclose(out_bf16, ref, atol=2e-2, rtol=2e-2), \
        float(jnp.max(jnp.abs(out_bf16 - ref)))

    print("KERNEL_OK")
</pallas_src>

<mosaic_0001>
module attributes {stable_mosaic.version = 11 : i64} {
  func.func @_fused_mha_kernel(%arg0: i32, %arg1: memref<8x32xf32, #tpu.memory_space<vmem>>, %arg2: memref<32x96xf32, #tpu.memory_space<vmem>>, %arg3: memref<1x96xf32, #tpu.memory_space<vmem>>, %arg4: memref<32x32xf32, #tpu.memory_space<vmem>>, %arg5: memref<1x32xf32, #tpu.memory_space<vmem>>, %arg6: memref<8x32xf32, #tpu.memory_space<vmem>>, %arg7: memref<8x96xf32, #tpu.memory_space<vmem>>, %arg8: memref<8x32xf32, #tpu.memory_space<vmem>>) attributes {dimension_semantics = [#tpu.dimension_semantics<parallel>], iteration_bounds = array<i64: 2>, scalar_prefetch = 0 : i64, scratch_operands = 2 : i64, tpu.core_type = #tpu.core_type<tc>, window_params = [{transform_indices = @transform_0, window_bounds = array<i64: 8, 32>}, {pipeline_mode = #tpu.pipeline_mode<synchronous>, transform_indices = @transform_1, window_bounds = array<i64: 32, 96>}, {pipeline_mode = #tpu.pipeline_mode<synchronous>, transform_indices = @transform_2, window_bounds = array<i64: 1, 96>}, {pipeline_mode = #tpu.pipeline_mode<synchronous>, transform_indices = @transform_3, window_bounds = array<i64: 32, 32>}, {pipeline_mode = #tpu.pipeline_mode<synchronous>, transform_indices = @transform_4, window_bounds = array<i64: 1, 32>}, {transform_indices = @transform_5, window_bounds = array<i64: 8, 32>}]} {
    %c0 = arith.constant 0 : index
    %c0_0 = arith.constant 0 : index
    %0 = vector.load %arg1[%c0, %c0_0] : memref<8x32xf32, #tpu.memory_space<vmem>>, vector<8x32xf32>
    %c0_1 = arith.constant 0 : index
    %c0_2 = arith.constant 0 : index
    %1 = vector.load %arg2[%c0_1, %c0_2] : memref<32x96xf32, #tpu.memory_space<vmem>>, vector<32x96xf32>
    %cst = arith.constant dense<0.000000e+00> : vector<8x96xf32>
    %2 = tpu.matmul %0, %1, %cst {dimension_numbers = #tpu.dot_dimension_numbers<[1], [0], [0], [1], [0, 0, 1, 1], [], []>} : vector<8x32xf32>, vector<32x96xf32>, vector<8x96xf32> -> vector<8x96xf32>
    %c0_3 = arith.constant 0 : index
    %c0_4 = arith.constant 0 : index
    %3 = vector.load %arg3[%c0_3, %c0_4] : memref<1x96xf32, #tpu.memory_space<vmem>>, vector<1x96xf32>
    %4 = vector.broadcast %3 : vector<1x96xf32> to vector<8x96xf32>
    %5 = arith.addf %2, %4 : vector<8x96xf32>
    %c0_5 = arith.constant 0 : index
    %c0_6 = arith.constant 0 : index
    %6 = vector.load %arg7[%c0_5, %c0_6] : memref<8x96xf32, #tpu.memory_space<vmem>>, vector<8x96xf32>
    tpu.vector_store %arg7[%c0_5, %c0_6], %5 {strides = array<i32>} : memref<8x96xf32, #tpu.memory_space<vmem>>, vector<8x96xf32>,
    %c0_7 = arith.constant 0 : index
    %c0_8 = arith.constant 0 : index
    %7 = vector.load %arg7[%c0_7, %c0_8] : memref<8x96xf32, #tpu.memory_space<vmem>>, vector<8x16xf32>
    %c0_9 = arith.constant 0 : index
    %c32 = arith.constant 32 : index
    %8 = vector.load %arg7[%c0_9, %c32] : memref<8x96xf32, #tpu.memory_space<vmem>>, vector<8x16xf32>
    %c0_10 = arith.constant 0 : index
    %c64 = arith.constant 64 : index
    %9 = vector.load %arg7[%c0_10, %c64] : memref<8x96xf32, #tpu.memory_space<vmem>>, vector<8x16xf32>
    %cst_11 = arith.constant dense<0.000000e+00> : vector<8x8xf32>
    %10 = tpu.matmul %7, %8, %cst_11 {dimension_numbers = #tpu.dot_dimension_numbers<[1], [1], [0], [0], [0, 0, 1, 0], [], []>} : vector<8x16xf32>, vector<8x16xf32>, vector<8x8xf32> -> vector<8x8xf32>
    %cst_12 = arith.constant dense<0xFF800000> : vector<8xf32>
    %11 = vector.multi_reduction <maximumf>, %10, %cst_12 [1] : vector<8x8xf32> to vector<8xf32>
    %12 = vector.shape_cast %11 : vector<8xf32> to vector<8x1xf32>
    %13 = vector.broadcast %12 : vector<8x1xf32> to vector<8x8xf32>
    %14 = arith.subf %10, %13 : vector<8x8xf32>
    %15 = math.exp %14 : vector<8x8xf32>
    %cst_13 = arith.constant dense<0.000000e+00> : vector<8xf32>
    %16 = vector.multi_reduction <add>, %15, %cst_13 [1] : vector<8x8xf32> to vector<8xf32>
    %17 = vector.shape_cast %16 : vector<8xf32> to vector<8x1xf32>
    %18 = tpu.reciprocal %17 {approx = true} : vector<8x1xf32> -> vector<8x1xf32>
    %19 = vector.broadcast %18 : vector<8x1xf32> to vector<8x8xf32>
    %20 = arith.mulf %15, %19 : vector<8x8xf32>
    %cst_14 = arith.constant dense<0.000000e+00> : vector<8x16xf32>
    %21 = tpu.matmul %20, %9, %cst_14 {dimension_numbers = #tpu.dot_dimension_numbers<[1], [0], [0], [1], [0, 0, 1, 1], [], []>} : vector<8x8xf32>, vector<8x16xf32>, vector<8x16xf32> -> vector<8x16xf32>
    %c0_15 = arith.constant 0 : index
    %c0_16 = arith.constant 0 : index
    %22 = vector.load %arg8[%c0_15, %c0_16] : memref<8x32xf32, #tpu.memory_space<vmem>>, vector<8x16xf32>
    tpu.vector_store %arg8[%c0_15, %c0_16], %21 {strides = array<i32>} : memref<8x32xf32, #tpu.memory_space<vmem>>, vector<8x16xf32>,
    %c0_17 = arith.constant 0 : index
    %c16 = arith.constant 16 : index
    %23 = vector.load %arg7[%c0_17, %c16] : memref<8x96xf32, #tpu.memory_space<vmem>>, vector<8x16xf32>
    %c0_18 = arith.constant 0 : index
    %c48 = arith.constant 48 : index
    %24 = vector.load %arg7[%c0_18, %c48] : memref<8x96xf32, #tpu.memory_space<vmem>>, vector<8x16xf32>
    %c0_19 = arith.constant 0 : index
    %c80 = arith.constant 80 : index
    %25 = vector.load %arg7[%c0_19, %c80] : memref<8x96xf32, #tpu.memory_space<vmem>>, vector<8x16xf32>
    %cst_20 = arith.constant dense<0.000000e+00> : vector<8x8xf32>
    %26 = tpu.matmul %23, %24, %cst_20 {dimension_numbers = #tpu.dot_dimension_numbers<[1], [1], [0], [0], [0, 0, 1, 0], [], []>} : vector<8x16xf32>, vector<8x16xf32>, vector<8x8xf32> -> vector<8x8xf32>
    %cst_21 = arith.constant dense<0xFF800000> : vector<8xf32>
    %27 = vector.multi_reduction <maximumf>, %26, %cst_21 [1] : vector<8x8xf32> to vector<8xf32>
    %28 = vector.shape_cast %27 : vector<8xf32> to vector<8x1xf32>
    %29 = vector.broadcast %28 : vector<8x1xf32> to vector<8x8xf32>
    %30 = arith.subf %26, %29 : vector<8x8xf32>
    %31 = math.exp %30 : vector<8x8xf32>
    %cst_22 = arith.constant dense<0.000000e+00> : vector<8xf32>
    %32 = vector.multi_reduction <add>, %31, %cst_22 [1] : vector<8x8xf32> to vector<8xf32>
    %33 = vector.shape_cast %32 : vector<8xf32> to vector<8x1xf32>
    %34 = tpu.reciprocal %33 {approx = true} : vector<8x1xf32> -> vector<8x1xf32>
    %35 = vector.broadcast %34 : vector<8x1xf32> to vector<8x8xf32>
    %36 = arith.mulf %31, %35 : vector<8x8xf32>
    %cst_23 = arith.constant dense<0.000000e+00> : vector<8x16xf32>
    %37 = tpu.matmul %36, %25, %cst_23 {dimension_numbers = #tpu.dot_dimension_numbers<[1], [0], [0], [1], [0, 0, 1, 1], [], []>} : vector<8x8xf32>, vector<8x16xf32>, vector<8x16xf32> -> vector<8x16xf32>
    %c0_24 = arith.constant 0 : index
    %c16_25 = arith.constant 16 : index
    %38 = vector.load %arg8[%c0_24, %c16_25] : memref<8x32xf32, #tpu.memory_space<vmem>>, vector<8x16xf32>
    tpu.vector_store %arg8[%c0_24, %c16_25], %37 {strides = array<i32>} : memref<8x32xf32, #tpu.memory_space<vmem>>, vector<8x16xf32>,
    %c0_26 = arith.constant 0 : index
    %c0_27 = arith.constant 0 : index
    %39 = vector.load %arg8[%c0_26, %c0_27] : memref<8x32xf32, #tpu.memory_space<vmem>>, vector<8x32xf32>
    %c0_28 = arith.constant 0 : index
    %c0_29 = arith.constant 0 : index
    %40 = vector.load %arg4[%c0_28, %c0_29] : memref<32x32xf32, #tpu.memory_space<vmem>>, vector<32x32xf32>
    %cst_30 = arith.constant dense<0.000000e+00> : vector<8x32xf32>
    %41 = tpu.matmul %39, %40, %cst_30 {dimension_numbers = #tpu.dot_dimension_numbers<[1], [0], [0], [1], [0, 0, 1, 1], [], []>} : vector<8x32xf32>, vector<32x32xf32>, vector<8x32xf32> -> vector<8x32xf32>
    %c0_31 = arith.constant 0 : index
    %c0_32 = arith.constant 0 : index
    %42 = vector.load %arg5[%c0_31, %c0_32] : memref<1x32xf32, #tpu.memory_space<vmem>>, vector<1x32xf32>
    %43 = vector.broadcast %42 : vector<1x32xf32> to vector<8x32xf32>
    %44 = arith.addf %41, %43 : vector<8x32xf32>
    %c0_33 = arith.constant 0 : index
    %c0_34 = arith.constant 0 : index
    %45 = vector.load %arg6[%c0_33, %c0_34] : memref<8x32xf32, #tpu.memory_space<vmem>>, vector<8x32xf32>
    tpu.vector_store %arg6[%c0_33, %c0_34], %44 {strides = array<i32>} : memref<8x32xf32, #tpu.memory_space<vmem>>, vector<8x32xf32>,
    return
  }
  func.func @transform_0(%arg0: i32) -> (i32, i32) {
    %c0_i32 = arith.constant 0 : i32
    %c0_i32_0 = arith.constant 0 : i32
    return %arg0, %c0_i32 : i32, i32
  }
  func.func @transform_1(%arg0: i32) -> (i32, i32) {
    %c0_i32 = arith.constant 0 : i32
    %c0_i32_0 = arith.constant 0 : i32
    %c0_i32_1 = arith.constant 0 : i32
    return %c0_i32, %c0_i32_0 : i32, i32
  }
  func.func @transform_2(%arg0: i32) -> (i32, i32) {
    %c0_i32 = arith.constant 0 : i32
    %c0_i32_0 = arith.constant 0 : i32
    %c0_i32_1 = arith.constant 0 : i32
    return %c0_i32, %c0_i32_0 : i32, i32
  }
  func.func @transform_3(%arg0: i32) -> (i32, i32) {
    %c0_i32 = arith.constant 0 : i32
    %c0_i32_0 = arith.constant 0 : i32
    %c0_i32_1 = arith.constant 0 : i32
    return %c0_i32, %c0_i32_0 : i32, i32
  }
  func.func @transform_4(%arg0: i32) -> (i32, i32) {
    %c0_i32 = arith.constant 0 : i32
    %c0_i32_0 = arith.constant 0 : i32
    %c0_i32_1 = arith.constant 0 : i32
    return %c0_i32, %c0_i32_0 : i32, i32
  }
  func.func @transform_5(%arg0: i32) -> (i32, i32) {
    %c0_i32 = arith.constant 0 : i32
    %c0_i32_0 = arith.constant 0 : i32
    return %arg0, %c0_i32 : i32, i32
  }
}

module attributes {stable_mosaic.version = 11 : i64} {
  func.func @_fused_mha_kernel(%arg0: i32, %arg1: memref<8x32xf32, #tpu.memory_space<vmem>>, %arg2: memref<32x96xf32, #tpu.memory_space<vmem>>, %arg3: memref<1x96xf32, #tpu.memory_space<vmem>>, %arg4: memref<32x32xf32, #tpu.memory_space<vmem>>, %arg5: memref<1x32xf32, #tpu.memory_space<vmem>>, %arg6: memref<8x32xf32, #tpu.memory_space<vmem>>, %arg7: memref<8x96xf32, #tpu.memory_space<vmem>>, %arg8: memref<8x32xf32, #tpu.memory_space<vmem>>) attributes {dimension_semantics = [#tpu.dimension_semantics<parallel>], iteration_bounds = array<i64: 2>, scalar_prefetch = 0 : i64, scratch_operands = 2 : i64, tpu.core_type = #tpu.core_type<tc>, window_params = [{transform_indices = @transform_0, window_bounds = array<i64: 8, 32>}, {pipeline_mode = #tpu.pipeline_mode<synchronous>, transform_indices = @transform_1, window_bounds = array<i64: 32, 96>}, {pipeline_mode = #tpu.pipeline_mode<synchronous>, transform_indices = @transform_2, window_bounds = array<i64: 1, 96>}, {pipeline_mode = #tpu.pipeline_mode<synchronous>, transform_indices = @transform_3, window_bounds = array<i64: 32, 32>}, {pipeline_mode = #tpu.pipeline_mode<synchronous>, transform_indices = @transform_4, window_bounds = array<i64: 1, 32>}, {transform_indices = @transform_5, window_bounds = array<i64: 8, 32>}]} {
    %c0 = arith.constant 0 : index
    %c0_0 = arith.constant 0 : index
    %0 = vector.load %arg1[%c0, %c0_0] : memref<8x32xf32, #tpu.memory_space<vmem>>, vector<8x32xf32>
    %c0_1 = arith.constant 0 : index
    %c0_2 = arith.constant 0 : index
    %1 = vector.load %arg2[%c0_1, %c0_2] : memref<32x96xf32, #tpu.memory_space<vmem>>, vector<32x96xf32>
    %cst = arith.constant dense<0.000000e+00> : vector<8x96xf32>
    %2 = tpu.matmul %0, %1, %cst {dimension_numbers = #tpu.dot_dimension_numbers<[1], [0], [0], [1], [0, 0, 1, 1], [], []>} : vector<8x32xf32>, vector<32x96xf32>, vector<8x96xf32> -> vector<8x96xf32>
    %c0_3 = arith.constant 0 : index
    %c0_4 = arith.constant 0 : index
    %3 = vector.load %arg3[%c0_3, %c0_4] : memref<1x96xf32, #tpu.memory_space<vmem>>, vector<1x96xf32>
    %4 = vector.broadcast %3 : vector<1x96xf32> to vector<8x96xf32>
    %5 = arith.addf %2, %4 : vector<8x96xf32>
    %c0_5 = arith.constant 0 : index
    %c0_6 = arith.constant 0 : index
    %6 = vector.load %arg7[%c0_5, %c0_6] : memref<8x96xf32, #tpu.memory_space<vmem>>, vector<8x96xf32>
    tpu.vector_store %arg7[%c0_5, %c0_6], %5 {strides = array<i32>} : memref<8x96xf32, #tpu.memory_space<vmem>>, vector<8x96xf32>,
    %c0_7 = arith.constant 0 : index
    %c0_8 = arith.constant 0 : index
    %7 = vector.load %arg7[%c0_7, %c0_8] : memref<8x96xf32, #tpu.memory_space<vmem>>, vector<8x16xf32>
    %c0_9 = arith.constant 0 : index
    %c32 = arith.constant 32 : index
    %8 = vector.load %arg7[%c0_9, %c32] : memref<8x96xf32, #tpu.memory_space<vmem>>, vector<8x16xf32>
    %c0_10 = arith.constant 0 : index
    %c64 = arith.constant 64 : index
    %9 = vector.load %arg7[%c0_10, %c64] : memref<8x96xf32, #tpu.memory_space<vmem>>, vector<8x16xf32>
    %cst_11 = arith.constant dense<0.000000e+00> : vector<8x8xf32>
    %10 = tpu.matmul %7, %8, %cst_11 {dimension_numbers = #tpu.dot_dimension_numbers<[1], [1], [0], [0], [0, 0, 1, 0], [], []>} : vector<8x16xf32>, vector<8x16xf32>, vector<8x8xf32> -> vector<8x8xf32>
    %cst_12 = arith.constant dense<0xFF800000> : vector<8xf32>
    %11 = vector.multi_reduction <maximumf>, %10, %cst_12 [1] : vector<8x8xf32> to vector<8xf32>
    %12 = vector.shape_cast %11 : vector<8xf32> to vector<8x1xf32>
    %13 = vector.broadcast %12 : vector<8x1xf32> to vector<8x8xf32>
    %14 = arith.subf %10, %13 : vector<8x8xf32>
    %15 = math.exp %14 : vector<8x8xf32>
    %cst_13 = arith.constant dense<0.000000e+00> : vector<8xf32>
    %16 = vector.multi_reduction <add>, %15, %cst_13 [1] : vector<8x8xf32> to vector<8xf32>
    %17 = vector.shape_cast %16 : vector<8xf32> to vector<8x1xf32>
    %18 = tpu.reciprocal %17 {approx = true} : vector<8x1xf32> -> vector<8x1xf32>
    %19 = vector.broadcast %18 : vector<8x1xf32> to vector<8x8xf32>
    %20 = arith.mulf %15, %19 : vector<8x8xf32>
    %cst_14 = arith.constant dense<0.000000e+00> : vector<8x16xf32>
    %21 = tpu.matmul %20, %9, %cst_14 {dimension_numbers = #tpu.dot_dimension_numbers<[1], [0], [0], [1], [0, 0, 1, 1], [], []>} : vector<8x8xf32>, vector<8x16xf32>, vector<8x16xf32> -> vector<8x16xf32>
    %c0_15 = arith.constant 0 : index
    %c0_16 = arith.constant 0 : index
    %22 = vector.load %arg8[%c0_15, %c0_16] : memref<8x32xf32, #tpu.memory_space<vmem>>, vector<8x16xf32>
    tpu.vector_store %arg8[%c0_15, %c0_16], %21 {strides = array<i32>} : memref<8x32xf32, #tpu.memory_space<vmem>>, vector<8x16xf32>,
    %c0_17 = arith.constant 0 : index
    %c16 = arith.constant 16 : index
    %23 = vector.load %arg7[%c0_17, %c16] : memref<8x96xf32, #tpu.memory_space<vmem>>, vector<8x16xf32>
    %c0_18 = arith.constant 0 : index
    %c48 = arith.constant 48 : index
    %24 = vector.load %arg7[%c0_18, %c48] : memref<8x96xf32, #tpu.memory_space<vmem>>, vector<8x16xf32>
    %c0_19 = arith.constant 0 : index
    %c80 = arith.constant 80 : index
    %25 = vector.load %arg7[%c0_19, %c80] : memref<8x96xf32, #tpu.memory_space<vmem>>, vector<8x16xf32>
    %cst_20 = arith.constant dense<0.000000e+00> : vector<8x8xf32>
    %26 = tpu.matmul %23, %24, %cst_20 {dimension_numbers = #tpu.dot_dimension_numbers<[1], [1], [0], [0], [0, 0, 1, 0], [], []>} : vector<8x16xf32>, vector<8x16xf32>, vector<8x8xf32> -> vector<8x8xf32>
    %cst_21 = arith.constant dense<0xFF800000> : vector<8xf32>
    %27 = vector.multi_reduction <maximumf>, %26, %cst_21 [1] : vector<8x8xf32> to vector<8xf32>
    %28 = vector.shape_cast %27 : vector<8xf32> to vector<8x1xf32>
    %29 = vector.broadcast %28 : vector<8x1xf32> to vector<8x8xf32>
    %30 = arith.subf %26, %29 : vector<8x8xf32>
    %31 = math.exp %30 : vector<8x8xf32>
    %cst_22 = arith.constant dense<0.000000e+00> : vector<8xf32>
    %32 = vector.multi_reduction <add>, %31, %cst_22 [1] : vector<8x8xf32> to vector<8xf32>
    %33 = vector.shape_cast %32 : vector<8xf32> to vector<8x1xf32>
    %34 = tpu.reciprocal %33 {approx = true} : vector<8x1xf32> -> vector<8x1xf32>
    %35 = vector.broadcast %34 : vector<8x1xf32> to vector<8x8xf32>
    %36 = arith.mulf %31, %35 : vector<8x8xf32>
    %cst_23 = arith.constant dense<0.000000e+00> : vector<8x16xf32>
    %37 = tpu.matmul %36, %25, %cst_23 {dimension_numbers = #tpu.dot_dimension_numbers<[1], [0], [0], [1], [0, 0, 1, 1], [], []>} : vector<8x8xf32>, vector<8x16xf32>, vector<8x16xf32> -> vector<8x16xf32>
    %c0_24 = arith.constant 0 : index
    %c16_25 = arith.constant 16 : index
    %38 = vector.load %arg8[%c0_24, %c16_25] : memref<8x32xf32, #tpu.memory_space<vmem>>, vector<8x16xf32>
    tpu.vector_store %arg8[%c0_24, %c16_25], %37 {strides = array<i32>} : memref<8x32xf32, #tpu.memory_space<vmem>>, vector<8x16xf32>,
    %c0_26 = arith.constant 0 : index
    %c0_27 = arith.constant 0 : index
    %39 = vector.load %arg8[%c0_26, %c0_27] : memref<8x32xf32, #tpu.memory_space<vmem>>, vector<8x32xf32>
    %c0_28 = arith.constant 0 : index
    %c0_29 = arith.constant 0 : index
    %40 = vector.load %arg4[%c0_28, %c0_29] : memref<32x32xf32, #tpu.memory_space<vmem>>, vector<32x32xf32>
    %cst_30 = arith.constant dense<0.000000e+00> : vector<8x32xf32>
    %41 = tpu.matmul %39, %40, %cst_30 {dimension_numbers = #tpu.dot_dimension_numbers<[1], [0], [0], [1], [0, 0, 1, 1], [], []>} : vector<8x32xf32>, vector<32x32xf32>, vector<8x32xf32> -> vector<8x32xf32>
    %c0_31 = arith.constant 0 : index
    %c0_32 = arith.constant 0 : index
    %42 = vector.load %arg5[%c0_31, %c0_32] : memref<1x32xf32, #tpu.memory_space<vmem>>, vector<1x32xf32>
    %43 = vector.broadcast %42 : vector<1x32xf32> to vector<8x32xf32>
    %44 = arith.addf %41, %43 : vector<8x32xf32>
    %c0_33 = arith.constant 0 : index
    %c0_34 = arith.constant 0 : index
    %45 = vector.load %arg6[%c0_33, %c0_34] : memref<8x32xf32, #tpu.memory_space<vmem>>, vector<8x32xf32>
    tpu.vector_store %arg6[%c0_33, %c0_34], %44 {strides = array<i32>} : memref<8x32xf32, #tpu.memory_space<vmem>>, vector<8x32xf32>,
    return
  }
  func.func @transform_0(%arg0: i32) -> (i32, i32) {
    %c0_i32 = arith.constant 0 : i32
    %c0_i32_0 = arith.constant 0 : i32
    return %arg0, %c0_i32 : i32, i32
  }
  func.func @transform_1(%arg0: i32) -> (i32, i32) {
    %c0_i32 = arith.constant 0 : i32
    %c0_i32_0 = arith.constant 0 : i32
    %c0_i32_1 = arith.constant 0 : i32
    return %c0_i32, %c0_i32_0 : i32, i32
  }
  func.func @transform_2(%arg0: i32) -> (i32, i32) {
    %c0_i32 = arith.constant 0 : i32
    %c0_i32_0 = arith.constant 0 : i32
    %c0_i32_1 = arith.constant 0 : i32
    return %c0_i32, %c0_i32_0 : i32, i32
  }
  func.func @transform_3(%arg0: i32) -> (i32, i32) {
    %c0_i32 = arith.constant 0 : i32
    %c0_i32_0 = arith.constant 0 : i32
    %c0_i32_1 = arith.constant 0 : i32
    return %c0_i32, %c0_i32_0 : i32, i32
  }
  func.func @transform_4(%arg0: i32) -> (i32, i32) {
    %c0_i32 = arith.constant 0 : i32
    %c0_i32_0 = arith.constant 0 : i32
    %c0_i32_1 = arith.constant 0 : i32
    return %c0_i32, %c0_i32_0 : i32, i32
  }
  func.func @transform_5(%arg0: i32) -> (i32, i32) {
    %c0_i32 = arith.constant 0 : i32
    %c0_i32_0 = arith.constant 0 : i32
    return %arg0, %c0_i32 : i32, i32
  }
}

</mosaic_0001>

<llo_original>
// kernel: tpu_custom_call.1
$region0: #{tpu_custom_call.1}
  #allocation0 [shape = 'u32[]', space=smem, size = 0x4, offset = 0x4, fixed_abs, tag = 'smem constant byte address 0x4 - core index']
  #allocation1 [shape = 'u32[72,128]{1,0:T(1,128)}', space=vmem, size = 0x9000, scoped, tag = 'internal scratch']
  #allocation2 [shape = 'f32[8,96]{1,0:T(8,128)}', space=vmem, size = 0x1000, scoped, tag = 'scratch operand']
  #allocation3 [shape = 'f32[8,32]{1,0:T(8,128)}', space=vmem, size = 0x1000, scoped, tag = 'scratch operand']
  %s0 = inlined_call_operand.hbm [shape: f32[16,32], index: 0, kind: input, shape index: {}]
  %s1 = inlined_call_operand.hbm [shape: f32[32,96], index: 1, kind: input, shape index: {}]
  %s2 = inlined_call_operand.vmem [shape: f32[1,96], index: 2, kind: input, shape index: {}]
  %s3 = inlined_call_operand.hbm [shape: f32[32,32], index: 3, kind: input, shape index: {}]
  %s4 = inlined_call_operand.vmem [shape: f32[1,32], index: 4, kind: input, shape index: {}]
  %s5 = inlined_call_operand.hbm [shape: f32[16,32], index: 5, kind: output, shape index: {}]
  %s6 = sld [smem:[#allocation0]]
  $region65: #{tpu_custom_call.1} parent=0
    _
  %s8 = ssub.s32 1, %s6
  %s9 = scalar_select 0, %s8, %s6
  $region1: #{tpu_custom_call.1} parent=0
    #allocation4 [shape = 'u8[8192]{0}', space=vmem, size = 0x2000, scoped, tag = 'input window, operand 0']
    #allocation5 [shape = 's32[2]{0}', space=sflag, size = 0x8, scoped, tag = 'scoped memory for tpu_custom_call.1']
    #allocation6 [shape = 's32[2]{0}', space=sflag, size = 0x8, scoped, tag = 'scoped memory for tpu_custom_call.1']
    #allocation7 [shape = 'u8[16384]{0}', space=vmem, size = 0x4000, scoped, tag = 'input window, operand 1, single buffered']
    #allocation8 [shape = 's32[1]{0}', space=sflag, size = 0x4, scoped, tag = 'scoped memory for tpu_custom_call.1']
    #allocation9 [shape = 'u8[16384]{0}', space=vmem, size = 0x4000, scoped, tag = 'input window, operand 3, single buffered']
    #allocation10 [shape = 'u8[8192]{0}', space=vmem, size = 0x2000, scoped, tag = 'output window, operand 0']
    %10 = vsyncpa [#allocation5], 0
    %s11 = scalar_lea.sflag [#allocation5], 1
    %12 = vsyncpa %s11, 0
    %13 = vsyncpa [#allocation8], 0
    %14 = vsyncpa [#allocation6], 0
    %s15 = scalar_lea.sflag [#allocation6], 1
    %16 = vsyncpa %s15, 0
    loop: start=0, step=1, limit=4
    $region2: #{tpu_custom_call.1} parent=1 // loop_pre_header
      _
    $region3: #{tpu_custom_call.1} parent=1 // loop_header
      %s18 = sphi 0, %s22
      %p19 = scmp.ge.s32.totalorder %s18, 4
      %s28 = sphi 0, %s30
      %s31 = sphi 0, %s28
      %s32 = sphi 0, %s31
      %s48 = sphi 0, %s32
      %s52 = sphi 0, %s52
      %s54 = sphi 0, %s52
      %s55 = sphi 0, %s54
      %s69 = sphi 0, %s55
      %s73 = sphi 0, %s73
      %s75 = sphi 0, %s73
      %s76 = sphi 0, %s75
      %s90 = sphi 0, %s76
      %s94 = sphi 0, %s94
      %s96 = sphi 0, %s94
      %s97 = sphi 0, %s96
      %s111 = sphi 0, %s97
      %s115 = sphi 0, %s115
      %s117 = sphi 0, %s115
      %s118 = sphi 0, %s117
      %s132 = sphi 0, %s118
      %s138 = sphi 0, %s140
      %s141 = sphi 0, %s138
      %s142 = sphi 0, %s141
      %s158 = sphi 0, %s142
    $region4: #{tpu_custom_call.1} parent=1 // loop_header_branch
      %21 = sbr.rel (%p19) target = $region8
    $region5: #{tpu_custom_call.1} parent=1 // loop_body
      %s23 = ssub.s32 %s18, 1
      %s24 = ssub.s32 %s18, 2
      %s25 = sadd.s32 %s18, 1
      %s26 = ssub.s32 %s18, %s25
      %p27 = scmp.eq.s32.totalorder %s26, 0
      %s29 = sadd.s32 %s28, 1
      %s30 = scalar_select %p27, %s28, %s29
      %p33 = pneg %p27
      %p34 = scmp.eq.s32.totalorder %s18, 1
      %p35 = por %p33, %p34
      %p36 = scmp.ne.s32.totalorder %s28, %s31
      %p37 = scmp.eq.s32.totalorder %s18, 0
      %p38 = por %p36, %p37
      %p39 = scmp.ne.s32.totalorder %s28, %s31
      %p40 = scmp.eq.s32.totalorder %s23, 1
      %p41 = por %p39, %p40
      %p42 = scmp.ne.s32.totalorder %s31, %s32
      %p43 = scmp.eq.s32.totalorder %s23, 0
      %p44 = por %p42, %p43
      %p45 = scmp.ne.s32.totalorder %s31, %s32
      %p46 = scmp.eq.s32.totalorder %s24, 1
      %p47 = por %p45, %p46
      %p49 = scmp.ne.s32.totalorder %s32, %s48
      %p50 = scmp.eq.s32.totalorder %s24, 0
      %p51 = por %p49, %p50
      %s53 = sadd.s32 %s52, 1
      %p56 = scmp.eq.s32.totalorder %s18, 1
      %p57 = scmp.ne.s32.totalorder %s52, %s54
      %p58 = scmp.eq.s32.totalorder %s18, 0
      %p59 = por %p57, %p58
      %p60 = scmp.ne.s32.totalorder %s52, %s54
      %p61 = scmp.eq.s32.totalorder %s23, 1
      %p62 = por %p60, %p61
      %p63 = scmp.ne.s32.totalorder %s54, %s55
      %p64 = scmp.eq.s32.totalorder %s23, 0
      %p65 = por %p63, %p64
      %p66 = scmp.ne.s32.totalorder %s54, %s55
      %p67 = scmp.eq.s32.totalorder %s24, 1
      %p68 = por %p66, %p67
      %p70 = scmp.ne.s32.totalorder %s55, %s69
      %p71 = scmp.eq.s32.totalorder %s24, 0
      %p72 = por %p70, %p71
      %s74 = sadd.s32 %s73, 1
      %p77 = scmp.eq.s32.totalorder %s18, 1
      %p78 = scmp.ne.s32.totalorder %s73, %s75
      %p79 = scmp.eq.s32.totalorder %s18, 0
      %p80 = por %p78, %p79
      %p81 = scmp.ne.s32.totalorder %s73, %s75
      %p82 = scmp.eq.s32.totalorder %s23, 1
      %p83 = por %p81, %p82
      %p84 = scmp.ne.s32.totalorder %s75, %s76
      %p85 = scmp.eq.s32.totalorder %s23, 0
      %p86 = por %p84, %p85
      %p87 = scmp.ne.s32.totalorder %s75, %s76
      %p88 = scmp.eq.s32.totalorder %s24, 1
      %p89 = por %p87, %p88
      %p91 = scmp.ne.s32.totalorder %s76, %s90
      %p92 = scmp.eq.s32.totalorder %s24, 0
      %p93 = por %p91, %p92
      %s95 = sadd.s32 %s94, 1
      %p98 = scmp.eq.s32.totalorder %s18, 1
      %p99 = scmp.ne.s32.totalorder %s94, %s96
      %p100 = scmp.eq.s32.totalorder %s18, 0
      %p101 = por %p99, %p100
      %p102 = scmp.ne.s32.totalorder %s94, %s96
      %p103 = scmp.eq.s32.totalorder %s23, 1
      %p104 = por %p102, %p103
      %p105 = scmp.ne.s32.totalorder %s96, %s97
      %p106 = scmp.eq.s32.totalorder %s23, 0
      %p107 = por %p105, %p106
      %p108 = scmp.ne.s32.totalorder %s96, %s97
      %p109 = scmp.eq.s32.totalorder %s24, 1
      %p110 = por %p108, %p109
      %p112 = scmp.ne.s32.totalorder %s97, %s111
      %p113 = scmp.eq.s32.totalorder %s24, 0
      %p114 = por %p112, %p113
      %s116 = sadd.s32 %s115, 1
      %p119 = scmp.eq.s32.totalorder %s18, 1
      %p120 = scmp.ne.s32.totalorder %s115, %s117
      %p121 = scmp.eq.s32.totalorder %s18, 0
      %p122 = por %p120, %p121
      %p123 = scmp.ne.s32.totalorder %s115, %s117
      %p124 = scmp.eq.s32.totalorder %s23, 1
      %p125 = por %p123, %p124
      %p126 = scmp.ne.s32.totalorder %s117, %s118
      %p127 = scmp.eq.s32.totalorder %s23, 0
      %p128 = por %p126, %p127
      %p129 = scmp.ne.s32.totalorder %s117, %s118
      %p130 = scmp.eq.s32.totalorder %s24, 1
      %p131 = por %p129, %p130
      %p133 = scmp.ne.s32.totalorder %s118, %s132
      %p134 = scmp.eq.s32.totalorder %s24, 0
      %p135 = por %p133, %p134
      %s136 = ssub.s32 %s18, %s25
      %p137 = scmp.eq.s32.totalorder %s136, 0
      %s139 = sadd.s32 %s138, 1
      %s140 = scalar_select %p137, %s138, %s139
      %p143 = pneg %p137
      %p144 = scmp.eq.s32.totalorder %s18, 1
      %p145 = por %p143, %p144
      %p146 = scmp.ne.s32.totalorder %s138, %s141
      %p147 = scmp.eq.s32.totalorder %s18, 0
      %p148 = por %p146, %p147
      %p149 = scmp.ne.s32.totalorder %s138, %s141
      %p150 = scmp.eq.s32.totalorder %s23, 1
      %p151 = por %p149, %p150
      %p152 = scmp.ne.s32.totalorder %s141, %s142
      %p153 = scmp.eq.s32.totalorder %s23, 0
      %p154 = por %p152, %p153
      %p155 = scmp.ne.s32.totalorder %s141, %s142
      %p156 = scmp.eq.s32.totalorder %s24, 1
      %p157 = por %p155, %p156
      %p159 = scmp.ne.s32.totalorder %s142, %s158
      %p160 = scmp.eq.s32.totalorder %s24, 0
      %p161 = por %p159, %p160
      %p162 = scmp.le.s32.totalorder 1, %s18
      %p163 = scmp.lt.s32.totalorder %s18, 3
      %p164 = pnand %p162, %p163
      %p165 = pneg %p164
      // Predicated region
      $region9: #{tpu_custom_call.1} parent=5 // pred_check
        _
      $region10: #{tpu_custom_call.1} parent=5 // pred_check_branch
        %167 = sbr.rel (%p164) target = $region12
      $region11: #{tpu_custom_call.1} parent=5 // pred_region
        %s168 = ssub.s32 %s18, 1
        // Predicated region
        $region13: #{tpu_custom_call.1} parent=11 // pred_check
          %p169 = pneg %p65
        $region14: #{tpu_custom_call.1} parent=11 // pred_check_branch
          %171 = sbr.rel (%p169) target = $region16
        $region15: #{tpu_custom_call.1} parent=11 // pred_region
          %173 = vsyncadd [#allocation8], 0
          %s174 = sshll.u32 %s1, 4
          %s175 = int_to_ptr.hbm [resolvable:$true] %s174
          %s176 = sshll.u32 [#allocation7], 4
          %s177 = int_to_ptr.vmem [resolvable:$true] %s176
          %182 = dma.hbm_to_vmem [thread:$0]  %s175, 512, %s177, [#allocation8], 128, 128, 8
        $region16: #{tpu_custom_call.1} parent=11 // pred_fallthru
          _
        // Predicated region
        $region17: #{tpu_custom_call.1} parent=11 // pred_check
          %p183 = pneg %p86
        $region18: #{tpu_custom_call.1} parent=11 // pred_check_branch
          %185 = sbr.rel (%p183) target = $region20
        $region19: #{tpu_custom_call.1} parent=11 // pred_region
          _
        $region20: #{tpu_custom_call.1} parent=11 // pred_fallthru
          _
        // Predicated region
        $region21: #{tpu_custom_call.1} parent=11 // pred_check
          %p186 = pneg %p107
        $region22: #{tpu_custom_call.1} parent=11 // pred_check_branch
          %188 = sbr.rel (%p186) target = $region24
        $region23: #{tpu_custom_call.1} parent=11 // pred_region
          %190 = vsyncadd [#allocation8], 0
          %s191 = sshll.u32 %s3, 4
          %s192 = int_to_ptr.hbm [resolvable:$true] %s191
          %s193 = sshll.u32 [#allocation9], 4
          %s194 = int_to_ptr.vmem [resolvable:$true] %s193
          %199 = dma.hbm_to_vmem [thread:$0]  %s192, 512, %s194, [#allocation8], 128, 128, 8
        $region24: #{tpu_custom_call.1} parent=11 // pred_fallthru
          _
        // Predicated region
        $region25: #{tpu_custom_call.1} parent=11 // pred_check
          %p200 = pneg %p128
        $region26: #{tpu_custom_call.1} parent=11 // pred_check_branch
          %202 = sbr.rel (%p200) target = $region28
        $region27: #{tpu_custom_call.1} parent=11 // pred_region
          _
        $region28: #{tpu_custom_call.1} parent=11 // pred_fallthru
          _
      $region12: #{tpu_custom_call.1} parent=5 // pred_fallthru
        _
      %p203 = scmp.lt.s32.totalorder %s18, 2
      // Predicated region
      $region29: #{tpu_custom_call.1} parent=5 // pred_check
        %p204 = pneg %p203
      $region30: #{tpu_custom_call.1} parent=5 // pred_check_branch
        %206 = sbr.rel (%p204) target = $region32
      $region31: #{tpu_custom_call.1} parent=5 // pred_region
        // Predicated region
        $region33: #{tpu_custom_call.1} parent=31 // pred_check
          %p207 = pneg %p38
        $region34: #{tpu_custom_call.1} parent=31 // pred_check_branch
          %209 = sbr.rel (%p207) target = $region36
        $region35: #{tpu_custom_call.1} parent=31 // pred_region
          %s210 = sand.u32 %s28, 1
          %s211 = scalar_lea.sflag [#allocation5], %s210
          %s212 = sand.u32 %s28, 1
          %s213 = smul.addr %s212, 8
          %s214 = scalar_lea.vmem [#allocation4], %s213
          %216 = vsyncadd %s211, 0
          %s217 = smul.addr %s18, 8
          %s218 = scalar_lea.hbm %s0, %s217
          %s220 = sshll.u32 %s218, 4
          %s221 = int_to_ptr.hbm [resolvable:$true] %s220
          %s222 = sshll.u32 %s214, 4
          %s223 = int_to_ptr.vmem [resolvable:$true] %s222
          %225 = dma.hbm_to_vmem [thread:$0]  %s221, 128, %s223, %s211
        $region36: #{tpu_custom_call.1} parent=31 // pred_fallthru
          _
      $region32: #{tpu_custom_call.1} parent=5 // pred_fallthru
        _
      %p226 = scmp.le.s32.totalorder 1, %s18
      %p227 = scmp.lt.s32.totalorder %s18, 3
      %p228 = pnand %p226, %p227
      %p229 = pneg %p228
      // Predicated region
      $region37: #{tpu_custom_call.1} parent=5 // pred_check
        _
      $region38: #{tpu_custom_call.1} parent=5 // pred_check_branch
        %231 = sbr.rel (%p228) target = $region40
      $region39: #{tpu_custom_call.1} parent=5 // pred_region
        %s232 = ssub.s32 %s18, 1
        %s233 = sand.u32 %s31, 1
        %s234 = scalar_lea.sflag [#allocation5], %s233
        %s235 = sand.u32 %s31, 1
        %s236 = smul.addr %s235, 8
        %s237 = scalar_lea.vmem [#allocation4], %s236
        // Predicated region
        $region41: #{tpu_custom_call.1} parent=39 // pred_check
          %p238 = pneg %p44
        $region42: #{tpu_custom_call.1} parent=39 // pred_check_branch
          %240 = sbr.rel (%p238) target = $region44
        $region43: #{tpu_custom_call.1} parent=39 // pred_region
          %242 = dma.done %s234, 128
        $region44: #{tpu_custom_call.1} parent=39 // pred_fallthru
          _
        // Predicated region
        $region45: #{tpu_custom_call.1} parent=39 // pred_check
          %p243 = pneg %p65
        $region46: #{tpu_custom_call.1} parent=39 // pred_check_branch
          %245 = sbr.rel (%p243) target = $region48
        $region47: #{tpu_custom_call.1} parent=39 // pred_region
          %247 = dma.done [#allocation8], 512
        $region48: #{tpu_custom_call.1} parent=39 // pred_fallthru
          _
        // Predicated region
        $region49: #{tpu_custom_call.1} parent=39 // pred_check
          %p248 = pneg %p107
        $region50: #{tpu_custom_call.1} parent=39 // pred_check_branch
          %250 = sbr.rel (%p248) target = $region52
        $region51: #{tpu_custom_call.1} parent=39 // pred_region
          %252 = dma.done [#allocation8], 512
        $region52: #{tpu_custom_call.1} parent=39 // pred_fallthru
          _
        %s253 = sand.u32 %s31, 1
        %s254 = scalar_lea.sflag [#allocation5], %s253
        %s255 = sand.u32 %s31, 1
        %s256 = smul.addr %s255, 8
        %s257 = scalar_lea.vmem [#allocation4], %s256
        %p258 = pneg %p44
        %p259 = pneg %p41
        %p260 = pneg %p65
        %p261 = pneg %p62
        %p262 = pneg %p86
        %p263 = pneg %p83
        %p264 = pneg %p107
        %p265 = pneg %p104
        %p266 = pneg %p128
        %p267 = pneg %p125
        %p268 = pneg %p154
        %p269 = pneg %p151
        %s270 = sand.u32 %s141, 1
        %s271 = scalar_lea.sflag [#allocation6], %s270
        %s272 = sand.u32 %s141, 1
        %s273 = smul.addr %s272, 8
        %s274 = scalar_lea.vmem [#allocation10], %s273
        %v275 = vld [vmem:[%s237] sm:$0xff]
        %v276 = vld [vmem:[#allocation7] sm:$0xff]
        %v277 = vld [vmem:[#allocation7 + $0x8] sm:$0xff]
        %v278 = vld [vmem:[#allocation7 + $0x10] sm:$0xff]
        %v279 = vld [vmem:[#allocation7 + $0x18] sm:$0xff]
        %v280 = vld [vmem:[%s2] sm:$0x1]
        %v282 = vperm.slane %v280, 0
        %vm284 = vcmask 261120
        %v286 = vsel %vm284, %v275, 0
        %288 = vmatpush.msra.mxu0 0.0
        %289 = vmatpush.msra.mxu0 0.0
        %290 = vmatpush.msra.mxu0 0.0
        %291 = vmatpush.msra.mxu0 0.0
        %292 = vmatpush.msra.mxu0 0.0
        %293 = vmatpush.msra.mxu0 0.0
        %294 = vmatpush.msra.mxu0 0.0
        %295 = vmatpush.msra.mxu0 0.0
        %296 = vmatpush.msra.mxu0 0.0
        %297 = vmatpush.msra.mxu0 0.0
        %298 = vmatpush.msra.mxu0 0.0
        %299 = vmatpush.msra.mxu0 0.0
        %300 = vmatpush.msra.mxu0 %v279
        %301 = vmatpush.msra.mxu0 %v278
        %302 = vmatpush.msra.mxu0 %v277
        %303 = vmatpush.msra.mxu0 %v276
        %304 = vmatmul.f32.gmra.mxu0 %v286
        %v305 = vpop.f32.mrf.mxu0
        %v306 = vadd.f32 %v282, %v305
        %307 = vdwg.mxu0
        %vm308 = vcmask 785408
        %309 = vst.msk [vmem:[#allocation2] sm:$0xff] %vm308, %v306
        %v310 = vld [vmem:[#allocation2] sm:$0xff]
        %312 = vrot.lane.b32.xlu0 %v310, 96
        %v313 = vpop.permute.xlu0 %312
        %vm314 = vcmask 130048
        %v315 = vsel %vm314, %v310, 0
        %v317 = vsel %vm314, %v313, 0
        %319 = vmatpush.xpose.msra.mxu0 0.0
        %320 = vmatpush.xpose.msra.mxu0 0.0
        %321 = vmatpush.xpose.msra.mxu0 0.0
        %322 = vmatpush.xpose.msra.mxu0 0.0
        %323 = vmatpush.xpose.msra.mxu0 0.0
        %324 = vmatpush.xpose.msra.mxu0 0.0
        %325 = vmatpush.xpose.msra.mxu0 0.0
        %326 = vmatpush.xpose.msra.mxu0 0.0
        %327 = vmatpush.xpose.msra.mxu0 0.0
        %328 = vmatpush.xpose.msra.mxu0 0.0
        %329 = vmatpush.xpose.msra.mxu0 0.0
        %330 = vmatpush.xpose.msra.mxu0 0.0
        %331 = vmatpush.xpose.msra.mxu0 0.0
        %332 = vmatpush.xpose.msra.mxu0 0.0
        %333 = vmatpush.xpose.msra.mxu0 0.0
        %334 = vmatpush.xpose.msra.mxu0 %v317
        %335 = vmatmul.f32.gmra.mxu0 %v315
        %v336 = vpop.f32.mrf.mxu0
        %v337 = vadd.f32 0.0, %v336
        %338 = vdwg.mxu0
        %vm339 = vcmask 64512
        %v340 = vsel %vm339, %v337, -inf
        %341 = vmax.xlane.f32.xlu0 %v340
        %v342 = vpop.xlane.xlu0 %341
        %v343 = vsub.f32 %v337, %v342
        %v344 = vmul.f32 %v343, 1.442695
        %v345 = vpow.pop %v344
        %v346 = vsel %vm339, %v345, 0.0
        %347 = vadd.xlane.f32.xlu0 %v346
        %v348 = vpop.xlane.xlu0 %347
        %v349 = vrcp.pop %v348
        %v350 = vmul.f32 %v345, %v349
        %351 = vrot.lane.b32.xlu0 %v310, 64
        %v352 = vpop.permute.xlu0 %351
        %v355 = vsel %vm339, %v350, 0
        %357 = vmatpush.msra.mxu0 0.0
        %358 = vmatpush.msra.mxu0 0.0
        %359 = vmatpush.msra.mxu0 0.0
        %360 = vmatpush.msra.mxu0 0.0
        %361 = vmatpush.msra.mxu0 0.0
        %362 = vmatpush.msra.mxu0 0.0
        %363 = vmatpush.msra.mxu0 0.0
        %364 = vmatpush.msra.mxu0 0.0
        %365 = vmatpush.msra.mxu0 0.0
        %366 = vmatpush.msra.mxu0 0.0
        %367 = vmatpush.msra.mxu0 0.0
        %368 = vmatpush.msra.mxu0 0.0
        %369 = vmatpush.msra.mxu0 0.0
        %370 = vmatpush.msra.mxu0 0.0
        %371 = vmatpush.msra.mxu0 0.0
        %372 = vmatpush.msra.mxu0 %v352
        %373 = vmatmul.f32.gmra.mxu0 %v355
        %v374 = vpop.f32.mrf.mxu0
        %v375 = vadd.f32 0.0, %v374
        %376 = vdwg.mxu0
        %377 = vst.msk [vmem:[#allocation3] sm:$0xff] %vm314, %v375
        %v378 = vld [vmem:[#allocation2] sm:$0xff]
        %380 = vrot.lane.b32.xlu0 %v378, 112
        %v381 = vpop.permute.xlu0 %380
        %382 = vrot.lane.b32.xlu0 %v378, 80
        %v383 = vpop.permute.xlu0 %382
        %v384 = vsel %vm314, %v381, 0
        %v386 = vsel %vm314, %v383, 0
        %388 = vmatpush.xpose.msra.mxu0 0.0
        %389 = vmatpush.xpose.msra.mxu0 0.0
        %390 = vmatpush.xpose.msra.mxu0 0.0
        %391 = vmatpush.xpose.msra.mxu0 0.0
        %392 = vmatpush.xpose.msra.mxu0 0.0
        %393 = vmatpush.xpose.msra.mxu0 0.0
        %394 = vmatpush.xpose.msra.mxu0 0.0
        %395 = vmatpush.xpose.msra.mxu0 0.0
        %396 = vmatpush.xpose.msra.mxu0 0.0
        %397 = vmatpush.xpose.msra.mxu0 0.0
        %398 = vmatpush.xpose.msra.mxu0 0.0
        %399 = vmatpush.xpose.msra.mxu0 0.0
        %400 = vmatpush.xpose.msra.mxu0 0.0
        %401 = vmatpush.xpose.msra.mxu0 0.0
        %402 = vmatpush.xpose.msra.mxu0 0.0
        %403 = vmatpush.xpose.msra.mxu0 %v386
        %404 = vmatmul.f32.gmra.mxu0 %v384
        %v405 = vpop.f32.mrf.mxu0
        %v406 = vadd.f32 0.0, %v405
        %407 = vdwg.mxu0
        %v408 = vsel %vm339, %v406, -inf
        %409 = vmax.xlane.f32.xlu0 %v408
        %v410 = vpop.xlane.xlu0 %409
        %v411 = vsub.f32 %v406, %v410
        %v412 = vmul.f32 %v411, 1.442695
        %v413 = vpow.pop %v412
        %v414 = vsel %vm339, %v413, 0.0
        %415 = vadd.xlane.f32.xlu0 %v414
        %v416 = vpop.xlane.xlu0 %415
        %v417 = vrcp.pop %v416
        %v418 = vmul.f32 %v413, %v417
        %419 = vrot.lane.b32.xlu0 %v378, 48
        %v420 = vpop.permute.xlu0 %419
        %v423 = vsel %vm339, %v418, 0
        %425 = vmatpush.msra.mxu0 0.0
        %426 = vmatpush.msra.mxu0 0.0
        %427 = vmatpush.msra.mxu0 0.0
        %428 = vmatpush.msra.mxu0 0.0
        %429 = vmatpush.msra.mxu0 0.0
        %430 = vmatpush.msra.mxu0 0.0
        %431 = vmatpush.msra.mxu0 0.0
        %432 = vmatpush.msra.mxu0 0.0
        %433 = vmatpush.msra.mxu0 0.0
        %434 = vmatpush.msra.mxu0 0.0
        %435 = vmatpush.msra.mxu0 0.0
        %436 = vmatpush.msra.mxu0 0.0
        %437 = vmatpush.msra.mxu0 0.0
        %438 = vmatpush.msra.mxu0 0.0
        %439 = vmatpush.msra.mxu0 0.0
        %440 = vmatpush.msra.mxu0 %v420
        %441 = vmatmul.f32.gmra.mxu0 %v423
        %v442 = vpop.f32.mrf.mxu0
        %v443 = vadd.f32 0.0, %v442
        %444 = vdwg.mxu0
        %446 = vrot.lane.b32.xlu0 %v443, 16
        %v447 = vpop.permute.xlu0 %446
        %vm449 = vcmask 261248
        %450 = vst.msk [vmem:[#allocation3] sm:$0xff] %vm449, %v447
        %v451 = vld [vmem:[#allocation3] sm:$0xff]
        %v452 = vld [vmem:[#allocation9] sm:$0xff]
        %v453 = vld [vmem:[#allocation9 + $0x8] sm:$0xff]
        %v454 = vld [vmem:[#allocation9 + $0x10] sm:$0xff]
        %v455 = vld [vmem:[#allocation9 + $0x18] sm:$0xff]
        %v456 = vld [vmem:[%s4] sm:$0x1]
        %v458 = vperm.slane %v456, 0
        %v461 = vsel %vm284, %v451, 0
        %463 = vmatpush.msra.mxu0 0.0
        %464 = vmatpush.msra.mxu0 0.0
        %465 = vmatpush.msra.mxu0 0.0
        %466 = vmatpush.msra.mxu0 0.0
        %467 = vmatpush.msra.mxu0 0.0
        %468 = vmatpush.msra.mxu0 0.0
        %469 = vmatpush.msra.mxu0 0.0
        %470 = vmatpush.msra.mxu0 0.0
        %471 = vmatpush.msra.mxu0 0.0
        %472 = vmatpush.msra.mxu0 0.0
        %473 = vmatpush.msra.mxu0 0.0
        %474 = vmatpush.msra.mxu0 0.0
        %475 = vmatpush.msra.mxu0 %v455
        %476 = vmatpush.msra.mxu0 %v454
        %477 = vmatpush.msra.mxu0 %v453
        %478 = vmatpush.msra.mxu0 %v452
        %479 = vmatmul.f32.gmra.mxu0 %v461
        %v480 = vpop.f32.mrf.mxu0
        %v481 = vadd.f32 %v458, %v480
        %482 = vdwg.mxu0
        %483 = vst.msk [vmem:[%s274] sm:$0xff] %vm284, %v481
        %s484 = sand.u32 %s141, 1
        %s485 = scalar_lea.sflag [#allocation6], %s484
        %s486 = sand.u32 %s141, 1
        %s487 = smul.addr %s486, 8
        %s488 = scalar_lea.vmem [#allocation10], %s487
        // Predicated region
        $region53: #{tpu_custom_call.1} parent=39 // pred_check
          %p489 = pneg %p151
        $region54: #{tpu_custom_call.1} parent=39 // pred_check_branch
          %491 = sbr.rel (%p489) target = $region56
        $region55: #{tpu_custom_call.1} parent=39 // pred_region
          %493 = vsyncadd %s485, 0
          %s494 = smul.addr %s23, 8
          %s495 = scalar_lea.hbm %s5, %s494
          %s497 = sshll.u32 %s488, 4
          %s498 = int_to_ptr.vmem [resolvable:$true] %s497
          %s499 = sshll.u32 %s495, 4
          %s500 = int_to_ptr.hbm [resolvable:$true] %s499
          %502 = dma.vmem_to_hbm [thread:$0]  %s498, 128, %s500, %s485
        $region56: #{tpu_custom_call.1} parent=39 // pred_fallthru
          _
      $region40: #{tpu_custom_call.1} parent=5 // pred_fallthru
        _
      %p503 = scmp.le.s32.totalorder 2, %s18
      // Predicated region
      $region57: #{tpu_custom_call.1} parent=5 // pred_check
        %p504 = pneg %p503
      $region58: #{tpu_custom_call.1} parent=5 // pred_check_branch
        %506 = sbr.rel (%p504) target = $region60
      $region59: #{tpu_custom_call.1} parent=5 // pred_region
        %s507 = ssub.s32 %s18, 2
        // Predicated region
        $region61: #{tpu_custom_call.1} parent=59 // pred_check
          %p508 = pneg %p157
        $region62: #{tpu_custom_call.1} parent=59 // pred_check_branch
          %510 = sbr.rel (%p508) target = $region64
        $region63: #{tpu_custom_call.1} parent=59 // pred_region
          %s511 = sand.u32 %s142, 1
          %s512 = scalar_lea.sflag [#allocation6], %s511
          %s513 = sand.u32 %s142, 1
          %s514 = smul.addr %s513, 8
          %s515 = scalar_lea.vmem [#allocation10], %s514
          %517 = dma.done %s512, 128
        $region64: #{tpu_custom_call.1} parent=59 // pred_fallthru
          _
      $region60: #{tpu_custom_call.1} parent=5 // pred_fallthru
        _
    $region6: #{tpu_custom_call.1} parent=1 // loop_footer
      %s22 = sadd.s32 1, %s18
    $region7: #{tpu_custom_call.1} parent=1 // loop_footer_branch
      %17 = sbr.rel target = $region3
    $region8: #{tpu_custom_call.1} parent=1 // loop_exit
      _
    %518 = vsyncpa [#allocation5], 1
    %s519 = scalar_lea.sflag [#allocation5], 1
    %520 = vsyncpa %s519, 1
    %521 = vsyncpa [#allocation8], 1
    %522 = vsyncpa [#allocation6], 1
    %s523 = scalar_lea.sflag [#allocation6], 1
    %524 = vsyncpa %s523, 1

// kernel: tpu_custom_call.1
$region0: #{tpu_custom_call.1}
  #allocation0 [shape = 'u32[]', space=smem, size = 0x4, offset = 0x4, fixed_abs, tag = 'smem constant byte address 0x4 - core index']
  #allocation1 [shape = 'u32[72,128]{1,0:T(1,128)}', space=vmem, size = 0x9000, scoped, tag = 'internal scratch']
  #allocation2 [shape = 'f32[8,96]{1,0:T(8,128)}', space=vmem, size = 0x1000, scoped, tag = 'scratch operand']
  #allocation3 [shape = 'f32[8,32]{1,0:T(8,128)}', space=vmem, size = 0x1000, scoped, tag = 'scratch operand']
  %s0 = inlined_call_operand.hbm [shape: f32[16,32], index: 0, kind: input, shape index: {}]
  %s1 = inlined_call_operand.hbm [shape: f32[32,96], index: 1, kind: input, shape index: {}]
  %s2 = inlined_call_operand.vmem [shape: f32[1,96], index: 2, kind: input, shape index: {}]
  %s3 = inlined_call_operand.hbm [shape: f32[32,32], index: 3, kind: input, shape index: {}]
  %s4 = inlined_call_operand.vmem [shape: f32[1,32], index: 4, kind: input, shape index: {}]
  %s5 = inlined_call_operand.hbm [shape: f32[16,32], index: 5, kind: output, shape index: {}]
  %s6 = sld [smem:[#allocation0]]
  $region65: #{tpu_custom_call.1} parent=0
    _
  %s8 = ssub.s32 1, %s6
  %s9 = scalar_select 0, %s8, %s6
  $region1: #{tpu_custom_call.1} parent=0
    #allocation4 [shape = 'u8[8192]{0}', space=vmem, size = 0x2000, scoped, tag = 'input window, operand 0']
    #allocation5 [shape = 's32[2]{0}', space=sflag, size = 0x8, scoped, tag = 'scoped memory for tpu_custom_call.1']
    #allocation6 [shape = 's32[2]{0}', space=sflag, size = 0x8, scoped, tag = 'scoped memory for tpu_custom_call.1']
    #allocation7 [shape = 'u8[16384]{0}', space=vmem, size = 0x4000, scoped, tag = 'input window, operand 1, single buffered']
    #allocation8 [shape = 's32[1]{0}', space=sflag, size = 0x4, scoped, tag = 'scoped memory for tpu_custom_call.1']
    #allocation9 [shape = 'u8[16384]{0}', space=vmem, size = 0x4000, scoped, tag = 'input window, operand 3, single buffered']
    #allocation10 [shape = 'u8[8192]{0}', space=vmem, size = 0x2000, scoped, tag = 'output window, operand 0']
    %10 = vsyncpa [#allocation5], 0
    %s11 = scalar_lea.sflag [#allocation5], 1
    %12 = vsyncpa %s11, 0
    %13 = vsyncpa [#allocation8], 0
    %14 = vsyncpa [#allocation6], 0
    %s15 = scalar_lea.sflag [#allocation6], 1
    %16 = vsyncpa %s15, 0
    loop: start=0, step=1, limit=4
    $region2: #{tpu_custom_call.1} parent=1 // loop_pre_header
      _
    $region3: #{tpu_custom_call.1} parent=1 // loop_header
      %s18 = sphi 0, %s22
      %p19 = scmp.ge.s32.totalorder %s18, 4
      %s28 = sphi 0, %s30
      %s31 = sphi 0, %s28
      %s32 = sphi 0, %s31
      %s48 = sphi 0, %s32
      %s52 = sphi 0, %s52
      %s54 = sphi 0, %s52
      %s55 = sphi 0, %s54
      %s69 = sphi 0, %s55
      %s73 = sphi 0, %s73
      %s75 = sphi 0, %s73
      %s76 = sphi 0, %s75
      %s90 = sphi 0, %s76
      %s94 = sphi 0, %s94
      %s96 = sphi 0, %s94
      %s97 = sphi 0, %s96
      %s111 = sphi 0, %s97
      %s115 = sphi 0, %s115
      %s117 = sphi 0, %s115
      %s118 = sphi 0, %s117
      %s132 = sphi 0, %s118
      %s138 = sphi 0, %s140
      %s141 = sphi 0, %s138
      %s142 = sphi 0, %s141
      %s158 = sphi 0, %s142
    $region4: #{tpu_custom_call.1} parent=1 // loop_header_branch
      %21 = sbr.rel (%p19) target = $region8
    $region5: #{tpu_custom_call.1} parent=1 // loop_body
      %s23 = ssub.s32 %s18, 1
      %s24 = ssub.s32 %s18, 2
      %s25 = sadd.s32 %s18, 1
      %s26 = ssub.s32 %s18, %s25
      %p27 = scmp.eq.s32.totalorder %s26, 0
      %s29 = sadd.s32 %s28, 1
      %s30 = scalar_select %p27, %s28, %s29
      %p33 = pneg %p27
      %p34 = scmp.eq.s32.totalorder %s18, 1
      %p35 = por %p33, %p34
      %p36 = scmp.ne.s32.totalorder %s28, %s31
      %p37 = scmp.eq.s32.totalorder %s18, 0
      %p38 = por %p36, %p37
      %p39 = scmp.ne.s32.totalorder %s28, %s31
      %p40 = scmp.eq.s32.totalorder %s23, 1
      %p41 = por %p39, %p40
      %p42 = scmp.ne.s32.totalorder %s31, %s32
      %p43 = scmp.eq.s32.totalorder %s23, 0
      %p44 = por %p42, %p43
      %p45 = scmp.ne.s32.totalorder %s31, %s32
      %p46 = scmp.eq.s32.totalorder %s24, 1
      %p47 = por %p45, %p46
      %p49 = scmp.ne.s32.totalorder %s32, %s48
      %p50 = scmp.eq.s32.totalorder %s24, 0
      %p51 = por %p49, %p50
      %s53 = sadd.s32 %s52, 1
      %p56 = scmp.eq.s32.totalorder %s18, 1
      %p57 = scmp.ne.s32.totalorder %s52, %s54
      %p58 = scmp.eq.s32.totalorder %s18, 0
      %p59 = por %p57, %p58
      %p60 = scmp.ne.s32.totalorder %s52, %s54
      %p61 = scmp.eq.s32.totalorder %s23, 1
      %p62 = por %p60, %p61
      %p63 = scmp.ne.s32.totalorder %s54, %s55
      %p64 = scmp.eq.s32.totalorder %s23, 0
      %p65 = por %p63, %p64
      %p66 = scmp.ne.s32.totalorder %s54, %s55
      %p67 = scmp.eq.s32.totalorder %s24, 1
      %p68 = por %p66, %p67
      %p70 = scmp.ne.s32.totalorder %s55, %s69
      %p71 = scmp.eq.s32.totalorder %s24, 0
      %p72 = por %p70, %p71
      %s74 = sadd.s32 %s73, 1
      %p77 = scmp.eq.s32.totalorder %s18, 1
      %p78 = scmp.ne.s32.totalorder %s73, %s75
      %p79 = scmp.eq.s32.totalorder %s18, 0
      %p80 = por %p78, %p79
      %p81 = scmp.ne.s32.totalorder %s73, %s75
      %p82 = scmp.eq.s32.totalorder %s23, 1
      %p83 = por %p81, %p82
      %p84 = scmp.ne.s32.totalorder %s75, %s76
      %p85 = scmp.eq.s32.totalorder %s23, 0
      %p86 = por %p84, %p85
      %p87 = scmp.ne.s32.totalorder %s75, %s76
      %p88 = scmp.eq.s32.totalorder %s24, 1
      %p89 = por %p87, %p88
      %p91 = scmp.ne.s32.totalorder %s76, %s90
      %p92 = scmp.eq.s32.totalorder %s24, 0
      %p93 = por %p91, %p92
      %s95 = sadd.s32 %s94, 1
      %p98 = scmp.eq.s32.totalorder %s18, 1
      %p99 = scmp.ne.s32.totalorder %s94, %s96
      %p100 = scmp.eq.s32.totalorder %s18, 0
      %p101 = por %p99, %p100
      %p102 = scmp.ne.s32.totalorder %s94, %s96
      %p103 = scmp.eq.s32.totalorder %s23, 1
      %p104 = por %p102, %p103
      %p105 = scmp.ne.s32.totalorder %s96, %s97
      %p106 = scmp.eq.s32.totalorder %s23, 0
      %p107 = por %p105, %p106
      %p108 = scmp.ne.s32.totalorder %s96, %s97
      %p109 = scmp.eq.s32.totalorder %s24, 1
      %p110 = por %p108, %p109
      %p112 = scmp.ne.s32.totalorder %s97, %s111
      %p113 = scmp.eq.s32.totalorder %s24, 0
      %p114 = por %p112, %p113
      %s116 = sadd.s32 %s115, 1
      %p119 = scmp.eq.s32.totalorder %s18, 1
      %p120 = scmp.ne.s32.totalorder %s115, %s117
      %p121 = scmp.eq.s32.totalorder %s18, 0
      %p122 = por %p120, %p121
      %p123 = scmp.ne.s32.totalorder %s115, %s117
      %p124 = scmp.eq.s32.totalorder %s23, 1
      %p125 = por %p123, %p124
      %p126 = scmp.ne.s32.totalorder %s117, %s118
      %p127 = scmp.eq.s32.totalorder %s23, 0
      %p128 = por %p126, %p127
      %p129 = scmp.ne.s32.totalorder %s117, %s118
      %p130 = scmp.eq.s32.totalorder %s24, 1
      %p131 = por %p129, %p130
      %p133 = scmp.ne.s32.totalorder %s118, %s132
      %p134 = scmp.eq.s32.totalorder %s24, 0
      %p135 = por %p133, %p134
      %s136 = ssub.s32 %s18, %s25
      %p137 = scmp.eq.s32.totalorder %s136, 0
      %s139 = sadd.s32 %s138, 1
      %s140 = scalar_select %p137, %s138, %s139
      %p143 = pneg %p137
      %p144 = scmp.eq.s32.totalorder %s18, 1
      %p145 = por %p143, %p144
      %p146 = scmp.ne.s32.totalorder %s138, %s141
      %p147 = scmp.eq.s32.totalorder %s18, 0
      %p148 = por %p146, %p147
      %p149 = scmp.ne.s32.totalorder %s138, %s141
      %p150 = scmp.eq.s32.totalorder %s23, 1
      %p151 = por %p149, %p150
      %p152 = scmp.ne.s32.totalorder %s141, %s142
      %p153 = scmp.eq.s32.totalorder %s23, 0
      %p154 = por %p152, %p153
      %p155 = scmp.ne.s32.totalorder %s141, %s142
      %p156 = scmp.eq.s32.totalorder %s24, 1
      %p157 = por %p155, %p156
      %p159 = scmp.ne.s32.totalorder %s142, %s158
      %p160 = scmp.eq.s32.totalorder %s24, 0
      %p161 = por %p159, %p160
      %p162 = scmp.le.s32.totalorder 1, %s18
      %p163 = scmp.lt.s32.totalorder %s18, 3
      %p164 = pnand %p162, %p163
      %p165 = pneg %p164
      // Predicated region
      $region9: #{tpu_custom_call.1} parent=5 // pred_check
        _
      $region10: #{tpu_custom_call.1} parent=5 // pred_check_branch
        %167 = sbr.rel (%p164) target = $region12
      $region11: #{tpu_custom_call.1} parent=5 // pred_region
        %s168 = ssub.s32 %s18, 1
        // Predicated region
        $region13: #{tpu_custom_call.1} parent=11 // pred_check
          %p169 = pneg %p65
        $region14: #{tpu_custom_call.1} parent=11 // pred_check_branch
          %171 = sbr.rel (%p169) target = $region16
        $region15: #{tpu_custom_call.1} parent=11 // pred_region
          %173 = vsyncadd [#allocation8], 0
          %s174 = sshll.u32 %s1, 4
          %s175 = int_to_ptr.hbm [resolvable:$true] %s174
          %s176 = sshll.u32 [#allocation7], 4
          %s177 = int_to_ptr.vmem [resolvable:$true] %s176
          %182 = dma.hbm_to_vmem [thread:$0]  %s175, 512, %s177, [#allocation8], 128, 128, 8
        $region16: #{tpu_custom_call.1} parent=11 // pred_fallthru
          _
        // Predicated region
        $region17: #{tpu_custom_call.1} parent=11 // pred_check
          %p183 = pneg %p86
        $region18: #{tpu_custom_call.1} parent=11 // pred_check_branch
          %185 = sbr.rel (%p183) target = $region20
        $region19: #{tpu_custom_call.1} parent=11 // pred_region
          _
        $region20: #{tpu_custom_call.1} parent=11 // pred_fallthru
          _
        // Predicated region
        $region21: #{tpu_custom_call.1} parent=11 // pred_check
          %p186 = pneg %p107
        $region22: #{tpu_custom_call.1} parent=11 // pred_check_branch
          %188 = sbr.rel (%p186) target = $region24
        $region23: #{tpu_custom_call.1} parent=11 // pred_region
          %190 = vsyncadd [#allocation8], 0
          %s191 = sshll.u32 %s3, 4
          %s192 = int_to_ptr.hbm [resolvable:$true] %s191
          %s193 = sshll.u32 [#allocation9], 4
          %s194 = int_to_ptr.vmem [resolvable:$true] %s193
          %199 = dma.hbm_to_vmem [thread:$0]  %s192, 512, %s194, [#allocation8], 128, 128, 8
        $region24: #{tpu_custom_call.1} parent=11 // pred_fallthru
          _
        // Predicated region
        $region25: #{tpu_custom_call.1} parent=11 // pred_check
          %p200 = pneg %p128
        $region26: #{tpu_custom_call.1} parent=11 // pred_check_branch
          %202 = sbr.rel (%p200) target = $region28
        $region27: #{tpu_custom_call.1} parent=11 // pred_region
          _
        $region28: #{tpu_custom_call.1} parent=11 // pred_fallthru
          _
      $region12: #{tpu_custom_call.1} parent=5 // pred_fallthru
        _
      %p203 = scmp.lt.s32.totalorder %s18, 2
      // Predicated region
      $region29: #{tpu_custom_call.1} parent=5 // pred_check
        %p204 = pneg %p203
      $region30: #{tpu_custom_call.1} parent=5 // pred_check_branch
        %206 = sbr.rel (%p204) target = $region32
      $region31: #{tpu_custom_call.1} parent=5 // pred_region
        // Predicated region
        $region33: #{tpu_custom_call.1} parent=31 // pred_check
          %p207 = pneg %p38
        $region34: #{tpu_custom_call.1} parent=31 // pred_check_branch
          %209 = sbr.rel (%p207) target = $region36
        $region35: #{tpu_custom_call.1} parent=31 // pred_region
          %s210 = sand.u32 %s28, 1
          %s211 = scalar_lea.sflag [#allocation5], %s210
          %s212 = sand.u32 %s28, 1
          %s213 = smul.addr %s212, 8
          %s214 = scalar_lea.vmem [#allocation4], %s213
          %216 = vsyncadd %s211, 0
          %s217 = smul.addr %s18, 8
          %s218 = scalar_lea.hbm %s0, %s217
          %s220 = sshll.u32 %s218, 4
          %s221 = int_to_ptr.hbm [resolvable:$true] %s220
          %s222 = sshll.u32 %s214, 4
          %s223 = int_to_ptr.vmem [resolvable:$true] %s222
          %225 = dma.hbm_to_vmem [thread:$0]  %s221, 128, %s223, %s211
        $region36: #{tpu_custom_call.1} parent=31 // pred_fallthru
          _
      $region32: #{tpu_custom_call.1} parent=5 // pred_fallthru
        _
      %p226 = scmp.le.s32.totalorder 1, %s18
      %p227 = scmp.lt.s32.totalorder %s18, 3
      %p228 = pnand %p226, %p227
      %p229 = pneg %p228
      // Predicated region
      $region37: #{tpu_custom_call.1} parent=5 // pred_check
        _
      $region38: #{tpu_custom_call.1} parent=5 // pred_check_branch
        %231 = sbr.rel (%p228) target = $region40
      $region39: #{tpu_custom_call.1} parent=5 // pred_region
        %s232 = ssub.s32 %s18, 1
        %s233 = sand.u32 %s31, 1
        %s234 = scalar_lea.sflag [#allocation5], %s233
        %s235 = sand.u32 %s31, 1
        %s236 = smul.addr %s235, 8
        %s237 = scalar_lea.vmem [#allocation4], %s236
        // Predicated region
        $region41: #{tpu_custom_call.1} parent=39 // pred_check
          %p238 = pneg %p44
        $region42: #{tpu_custom_call.1} parent=39 // pred_check_branch
          %240 = sbr.rel (%p238) target = $region44
        $region43: #{tpu_custom_call.1} parent=39 // pred_region
          %242 = dma.done %s234, 128
        $region44: #{tpu_custom_call.1} parent=39 // pred_fallthru
          _
        // Predicated region
        $region45: #{tpu_custom_call.1} parent=39 // pred_check
          %p243 = pneg %p65
        $region46: #{tpu_custom_call.1} parent=39 // pred_check_branch
          %245 = sbr.rel (%p243) target = $region48
        $region47: #{tpu_custom_call.1} parent=39 // pred_region
          %247 = dma.done [#allocation8], 512
        $region48: #{tpu_custom_call.1} parent=39 // pred_fallthru
          _
        // Predicated region
        $region49: #{tpu_custom_call.1} parent=39 // pred_check
          %p248 = pneg %p107
        $region50: #{tpu_custom_call.1} parent=39 // pred_check_branch
          %250 = sbr.rel (%p248) target = $region52
        $region51: #{tpu_custom_call.1} parent=39 // pred_region
          %252 = dma.done [#allocation8], 512
        $region52: #{tpu_custom_call.1} parent=39 // pred_fallthru
          _
        %s253 = sand.u32 %s31, 1
        %s254 = scalar_lea.sflag [#allocation5], %s253
        %s255 = sand.u32 %s31, 1
        %s256 = smul.addr %s255, 8
        %s257 = scalar_lea.vmem [#allocation4], %s256
        %p258 = pneg %p44
        %p259 = pneg %p41
        %p260 = pneg %p65
        %p261 = pneg %p62
        %p262 = pneg %p86
        %p263 = pneg %p83
        %p264 = pneg %p107
        %p265 = pneg %p104
        %p266 = pneg %p128
        %p267 = pneg %p125
        %p268 = pneg %p154
        %p269 = pneg %p151
        %s270 = sand.u32 %s141, 1
        %s271 = scalar_lea.sflag [#allocation6], %s270
        %s272 = sand.u32 %s141, 1
        %s273 = smul.addr %s272, 8
        %s274 = scalar_lea.vmem [#allocation10], %s273
        %v275 = vld [vmem:[%s237] sm:$0xff]
        %v276 = vld [vmem:[#allocation7] sm:$0xff]
        %v277 = vld [vmem:[#allocation7 + $0x8] sm:$0xff]
        %v278 = vld [vmem:[#allocation7 + $0x10] sm:$0xff]
        %v279 = vld [vmem:[#allocation7 + $0x18] sm:$0xff]
        %v280 = vld [vmem:[%s2] sm:$0x1]
        %v282 = vperm.slane %v280, 0
        %vm284 = vcmask 261120
        %v286 = vsel %vm284, %v275, 0
        %288 = vmatpush.msra.mxu0 0.0
        %289 = vmatpush.msra.mxu0 0.0
        %290 = vmatpush.msra.mxu0 0.0
        %291 = vmatpush.msra.mxu0 0.0
        %292 = vmatpush.msra.mxu0 0.0
        %293 = vmatpush.msra.mxu0 0.0
        %294 = vmatpush.msra.mxu0 0.0
        %295 = vmatpush.msra.mxu0 0.0
        %296 = vmatpush.msra.mxu0 0.0
        %297 = vmatpush.msra.mxu0 0.0
        %298 = vmatpush.msra.mxu0 0.0
        %299 = vmatpush.msra.mxu0 0.0
        %300 = vmatpush.msra.mxu0 %v279
        %301 = vmatpush.msra.mxu0 %v278
        %302 = vmatpush.msra.mxu0 %v277
        %303 = vmatpush.msra.mxu0 %v276
        %304 = vmatmul.f32.gmra.mxu0 %v286
        %v305 = vpop.f32.mrf.mxu0
        %v306 = vadd.f32 %v282, %v305
        %307 = vdwg.mxu0
        %vm308 = vcmask 785408
        %309 = vst.msk [vmem:[#allocation2] sm:$0xff] %vm308, %v306
        %v310 = vld [vmem:[#allocation2] sm:$0xff]
        %312 = vrot.lane.b32.xlu0 %v310, 96
        %v313 = vpop.permute.xlu0 %312
        %vm314 = vcmask 130048
        %v315 = vsel %vm314, %v310, 0
        %v317 = vsel %vm314, %v313, 0
        %319 = vmatpush.xpose.msra.mxu0 0.0
        %320 = vmatpush.xpose.msra.mxu0 0.0
        %321 = vmatpush.xpose.msra.mxu0 0.0
        %322 = vmatpush.xpose.msra.mxu0 0.0
        %323 = vmatpush.xpose.msra.mxu0 0.0
        %324 = vmatpush.xpose.msra.mxu0 0.0
        %325 = vmatpush.xpose.msra.mxu0 0.0
        %326 = vmatpush.xpose.msra.mxu0 0.0
        %327 = vmatpush.xpose.msra.mxu0 0.0
        %328 = vmatpush.xpose.msra.mxu0 0.0
        %329 = vmatpush.xpose.msra.mxu0 0.0
        %330 = vmatpush.xpose.msra.mxu0 0.0
        %331 = vmatpush.xpose.msra.mxu0 0.0
        %332 = vmatpush.xpose.msra.mxu0 0.0
        %333 = vmatpush.xpose.msra.mxu0 0.0
        %334 = vmatpush.xpose.msra.mxu0 %v317
        %335 = vmatmul.f32.gmra.mxu0 %v315
        %v336 = vpop.f32.mrf.mxu0
        %v337 = vadd.f32 0.0, %v336
        %338 = vdwg.mxu0
        %vm339 = vcmask 64512
        %v340 = vsel %vm339, %v337, -inf
        %341 = vmax.xlane.f32.xlu0 %v340
        %v342 = vpop.xlane.xlu0 %341
        %v343 = vsub.f32 %v337, %v342
        %v344 = vmul.f32 %v343, 1.442695
        %v345 = vpow.pop %v344
        %v346 = vsel %vm339, %v345, 0.0
        %347 = vadd.xlane.f32.xlu0 %v346
        %v348 = vpop.xlane.xlu0 %347
        %v349 = vrcp.pop %v348
        %v350 = vmul.f32 %v345, %v349
        %351 = vrot.lane.b32.xlu0 %v310, 64
        %v352 = vpop.permute.xlu0 %351
        %v355 = vsel %vm339, %v350, 0
        %357 = vmatpush.msra.mxu0 0.0
        %358 = vmatpush.msra.mxu0 0.0
        %359 = vmatpush.msra.mxu0 0.0
        %360 = vmatpush.msra.mxu0 0.0
        %361 = vmatpush.msra.mxu0 0.0
        %362 = vmatpush.msra.mxu0 0.0
        %363 = vmatpush.msra.mxu0 0.0
        %364 = vmatpush.msra.mxu0 0.0
        %365 = vmatpush.msra.mxu0 0.0
        %366 = vmatpush.msra.mxu0 0.0
        %367 = vmatpush.msra.mxu0 0.0
        %368 = vmatpush.msra.mxu0 0.0
        %369 = vmatpush.msra.mxu0 0.0
        %370 = vmatpush.msra.mxu0 0.0
        %371 = vmatpush.msra.mxu0 0.0
        %372 = vmatpush.msra.mxu0 %v352
        %373 = vmatmul.f32.gmra.mxu0 %v355
        %v374 = vpop.f32.mrf.mxu0
        %v375 = vadd.f32 0.0, %v374
        %376 = vdwg.mxu0
        %377 = vst.msk [vmem:[#allocation3] sm:$0xff] %vm314, %v375
        %v378 = vld [vmem:[#allocation2] sm:$0xff]
        %380 = vrot.lane.b32.xlu0 %v378, 112
        %v381 = vpop.permute.xlu0 %380
        %382 = vrot.lane.b32.xlu0 %v378, 80
        %v383 = vpop.permute.xlu0 %382
        %v384 = vsel %vm314, %v381, 0
        %v386 = vsel %vm314, %v383, 0
        %388 = vmatpush.xpose.msra.mxu0 0.0
        %389 = vmatpush.xpose.msra.mxu0 0.0
        %390 = vmatpush.xpose.msra.mxu0 0.0
        %391 = vmatpush.xpose.msra.mxu0 0.0
        %392 = vmatpush.xpose.msra.mxu0 0.0
        %393 = vmatpush.xpose.msra.mxu0 0.0
        %394 = vmatpush.xpose.msra.mxu0 0.0
        %395 = vmatpush.xpose.msra.mxu0 0.0
        %396 = vmatpush.xpose.msra.mxu0 0.0
        %397 = vmatpush.xpose.msra.mxu0 0.0
        %398 = vmatpush.xpose.msra.mxu0 0.0
        %399 = vmatpush.xpose.msra.mxu0 0.0
        %400 = vmatpush.xpose.msra.mxu0 0.0
        %401 = vmatpush.xpose.msra.mxu0 0.0
        %402 = vmatpush.xpose.msra.mxu0 0.0
        %403 = vmatpush.xpose.msra.mxu0 %v386
        %404 = vmatmul.f32.gmra.mxu0 %v384
        %v405 = vpop.f32.mrf.mxu0
        %v406 = vadd.f32 0.0, %v405
        %407 = vdwg.mxu0
        %v408 = vsel %vm339, %v406, -inf
        %409 = vmax.xlane.f32.xlu0 %v408
        %v410 = vpop.xlane.xlu0 %409
        %v411 = vsub.f32 %v406, %v410
        %v412 = vmul.f32 %v411, 1.442695
        %v413 = vpow.pop %v412
        %v414 = vsel %vm339, %v413, 0.0
        %415 = vadd.xlane.f32.xlu0 %v414
        %v416 = vpop.xlane.xlu0 %415
        %v417 = vrcp.pop %v416
        %v418 = vmul.f32 %v413, %v417
        %419 = vrot.lane.b32.xlu0 %v378, 48
        %v420 = vpop.permute.xlu0 %419
        %v423 = vsel %vm339, %v418, 0
        %425 = vmatpush.msra.mxu0 0.0
        %426 = vmatpush.msra.mxu0 0.0
        %427 = vmatpush.msra.mxu0 0.0
        %428 = vmatpush.msra.mxu0 0.0
        %429 = vmatpush.msra.mxu0 0.0
        %430 = vmatpush.msra.mxu0 0.0
        %431 = vmatpush.msra.mxu0 0.0
        %432 = vmatpush.msra.mxu0 0.0
        %433 = vmatpush.msra.mxu0 0.0
        %434 = vmatpush.msra.mxu0 0.0
        %435 = vmatpush.msra.mxu0 0.0
        %436 = vmatpush.msra.mxu0 0.0
        %437 = vmatpush.msra.mxu0 0.0
        %438 = vmatpush.msra.mxu0 0.0
        %439 = vmatpush.msra.mxu0 0.0
        %440 = vmatpush.msra.mxu0 %v420
        %441 = vmatmul.f32.gmra.mxu0 %v423
        %v442 = vpop.f32.mrf.mxu0
        %v443 = vadd.f32 0.0, %v442
        %444 = vdwg.mxu0
        %446 = vrot.lane.b32.xlu0 %v443, 16
        %v447 = vpop.permute.xlu0 %446
        %vm449 = vcmask 261248
        %450 = vst.msk [vmem:[#allocation3] sm:$0xff] %vm449, %v447
        %v451 = vld [vmem:[#allocation3] sm:$0xff]
        %v452 = vld [vmem:[#allocation9] sm:$0xff]
        %v453 = vld [vmem:[#allocation9 + $0x8] sm:$0xff]
        %v454 = vld [vmem:[#allocation9 + $0x10] sm:$0xff]
        %v455 = vld [vmem:[#allocation9 + $0x18] sm:$0xff]
        %v456 = vld [vmem:[%s4] sm:$0x1]
        %v458 = vperm.slane %v456, 0
        %v461 = vsel %vm284, %v451, 0
        %463 = vmatpush.msra.mxu0 0.0
        %464 = vmatpush.msra.mxu0 0.0
        %465 = vmatpush.msra.mxu0 0.0
        %466 = vmatpush.msra.mxu0 0.0
        %467 = vmatpush.msra.mxu0 0.0
        %468 = vmatpush.msra.mxu0 0.0
        %469 = vmatpush.msra.mxu0 0.0
        %470 = vmatpush.msra.mxu0 0.0
        %471 = vmatpush.msra.mxu0 0.0
        %472 = vmatpush.msra.mxu0 0.0
        %473 = vmatpush.msra.mxu0 0.0
        %474 = vmatpush.msra.mxu0 0.0
        %475 = vmatpush.msra.mxu0 %v455
        %476 = vmatpush.msra.mxu0 %v454
        %477 = vmatpush.msra.mxu0 %v453
        %478 = vmatpush.msra.mxu0 %v452
        %479 = vmatmul.f32.gmra.mxu0 %v461
        %v480 = vpop.f32.mrf.mxu0
        %v481 = vadd.f32 %v458, %v480
        %482 = vdwg.mxu0
        %483 = vst.msk [vmem:[%s274] sm:$0xff] %vm284, %v481
        %s484 = sand.u32 %s141, 1
        %s485 = scalar_lea.sflag [#allocation6], %s484
        %s486 = sand.u32 %s141, 1
        %s487 = smul.addr %s486, 8
        %s488 = scalar_lea.vmem [#allocation10], %s487
        // Predicated region
        $region53: #{tpu_custom_call.1} parent=39 // pred_check
          %p489 = pneg %p151
        $region54: #{tpu_custom_call.1} parent=39 // pred_check_branch
          %491 = sbr.rel (%p489) target = $region56
        $region55: #{tpu_custom_call.1} parent=39 // pred_region
          %493 = vsyncadd %s485, 0
          %s494 = smul.addr %s23, 8
          %s495 = scalar_lea.hbm %s5, %s494
          %s497 = sshll.u32 %s488, 4
          %s498 = int_to_ptr.vmem [resolvable:$true] %s497
          %s499 = sshll.u32 %s495, 4
          %s500 = int_to_ptr.hbm [resolvable:$true] %s499
          %502 = dma.vmem_to_hbm [thread:$0]  %s498, 128, %s500, %s485
        $region56: #{tpu_custom_call.1} parent=39 // pred_fallthru
          _
      $region40: #{tpu_custom_call.1} parent=5 // pred_fallthru
        _
      %p503 = scmp.le.s32.totalorder 2, %s18
      // Predicated region
      $region57: #{tpu_custom_call.1} parent=5 // pred_check
        %p504 = pneg %p503
      $region58: #{tpu_custom_call.1} parent=5 // pred_check_branch
        %506 = sbr.rel (%p504) target = $region60
      $region59: #{tpu_custom_call.1} parent=5 // pred_region
        %s507 = ssub.s32 %s18, 2
        // Predicated region
        $region61: #{tpu_custom_call.1} parent=59 // pred_check
          %p508 = pneg %p157
        $region62: #{tpu_custom_call.1} parent=59 // pred_check_branch
          %510 = sbr.rel (%p508) target = $region64
        $region63: #{tpu_custom_call.1} parent=59 // pred_region
          %s511 = sand.u32 %s142, 1
          %s512 = scalar_lea.sflag [#allocation6], %s511
          %s513 = sand.u32 %s142, 1
          %s514 = smul.addr %s513, 8
          %s515 = scalar_lea.vmem [#allocation10], %s514
          %517 = dma.done %s512, 128
        $region64: #{tpu_custom_call.1} parent=59 // pred_fallthru
          _
      $region60: #{tpu_custom_call.1} parent=5 // pred_fallthru
        _
    $region6: #{tpu_custom_call.1} parent=1 // loop_footer
      %s22 = sadd.s32 1, %s18
    $region7: #{tpu_custom_call.1} parent=1 // loop_footer_branch
      %17 = sbr.rel target = $region3
    $region8: #{tpu_custom_call.1} parent=1 // loop_exit
      _
    %518 = vsyncpa [#allocation5], 1
    %s519 = scalar_lea.sflag [#allocation5], 1
    %520 = vsyncpa %s519, 1
    %521 = vsyncpa [#allocation8], 1
    %522 = vsyncpa [#allocation6], 1
    %s523 = scalar_lea.sflag [#allocation6], 1
    %524 = vsyncpa %s523, 1

</llo_original>
